<compile_context>
chip_gen: v7x
topology: tpu7x:2x2x1
jax: 0.10.0
libtpu: 0.0.40
codegen_flags: <defaults>
</compile_context>

<pallas_src>
import functools

import jax
import jax.numpy as jnp
from jax.experimental import pallas as pl
from jax.experimental.pallas import tpu as pltpu


def _gat_kernel(x_ref, xt_ref, u_ref, vt_ref, linw_ref, linb_ref, adj_ref,
                out_ref, *, head_n, alpha):
    # Folded projections: only the per-node scalars el / er are needed per head.
    #   el[i, h] = x_i . (W_h @ a_l_h)      ert[h, j] = x_j . (W_h @ a_r_h)
    el = jnp.dot(x_ref[...], u_ref[...],
                 preferred_element_type=jnp.float32)          # (Npad, H)
    ert = jnp.dot(vt_ref[...], xt_ref[...],
                  preferred_element_type=jnp.float32)         # (H, TN)

    acc = jnp.zeros(out_ref.shape, jnp.float32)               # (Npad, TN)
    for h in range(head_n):                                   # small, unrolled at trace time
        s = el[:, h:h + 1] + ert[h:h + 1, :]                  # s[i,j] = el[i,h] + er[j,h]
        s = jnp.maximum(s, alpha * s)                         # LeakyReLU (0 < alpha < 1)
        acc = acc + linw_ref[h] * s                           # nn.Linear(head_n,1) weight
    acc = acc + linb_ref[0]                                   # linear bias (scaled by adj
                                                              # below, as in the module)

    # Sparse scatter + mask derived from adj in-kernel (no separate mask input).
    adj = adj_ref[...]
    att = jnp.where(adj != 0.0, adj * acc, jnp.float32(-1e9))

    # softmax over dim 0 (column-wise); a full-height column block is self-contained.
    m = jnp.max(att, axis=0, keepdims=True)
    e = jnp.exp(att - m)
    denom = jnp.sum(e, axis=0, keepdims=True)                 # (1, TN)
    inv = pl.reciprocal(denom, approx=True)                   # EUP slot, N-independent cost
    inv = inv * (2.0 - denom * inv)                           # one Newton step -> f32 accuracy
    out_ref[...] = e * inv


def _pick_tn(npad, s, budget_bytes=24 * 1024 * 1024):
    """Largest lane-dense (multiple-of-128) column tile whose per-step working set
    (adj + out double-buffered + three (Npad, TN) f32 temporaries + x^T block)
    stays within a conservative VMEM budget (safe on v5e/v6e/v7x)."""
    for cand in (1024, 512, 256, 128):
        if npad % cand == 0 and (7 * npad * cand * 4 + 2 * s * cand * 4) <= budget_bytes:
            return cand
    return 128


def multi_heads_gat_layer(x, W, a_l, a_r, lin_w, lin_b, adj, *, alpha=0.2):
    b, n, s = x.shape
    N = b * n
    head_n = W.shape[0]

    x2 = x.reshape(N, s).astype(jnp.float32)

    # Fold attention vectors into the projections (pure parameter preprocessing):
    #   U[:, h] = W_h @ a_l_h   (S, H)        VT[h, :] = (W_h @ a_r_h)^T   (H, S)
    U = jnp.einsum("hsd,hd->sh", W.astype(jnp.float32), a_l.astype(jnp.float32))
    VT = jnp.einsum("hsd,hd->hs", W.astype(jnp.float32), a_r.astype(jnp.float32))

    # Pad node count to a lane-dense multiple of 128. Padded rows/cols have adj == 0,
    # so they are masked to -1e9 (exp underflows to exactly 0) and sliced away below.
    Npad = max(128, ((N + 127) // 128) * 128)
    TN = _pick_tn(Npad, s)

    xp = jnp.zeros((Npad, s), jnp.float32).at[:N].set(x2)
    xtp = xp.T                                   # one tiny (N,S) transpose, done once by XLA
    adjp = jnp.zeros((Npad, Npad), jnp.float32).at[:N, :N].set(adj.astype(jnp.float32))

    kernel = functools.partial(_gat_kernel, head_n=head_n, alpha=float(alpha))

    out = pl.pallas_call(
        kernel,
        out_shape=jax.ShapeDtypeStruct((Npad, Npad), jnp.float32),
        grid=(Npad // TN,),
        in_specs=[
            pl.BlockSpec((Npad, s), lambda j: (0, 0)),           # x      (resident)
            pl.BlockSpec((s, TN), lambda j: (0, j)),             # x^T    column block
            pl.BlockSpec((s, head_n), lambda j: (0, 0)),         # U      (resident)
            pl.BlockSpec((head_n, s), lambda j: (0, 0)),         # V^T    (resident)
            pl.BlockSpec(memory_space=pltpu.MemorySpace.SMEM),   # lin_w
            pl.BlockSpec(memory_space=pltpu.MemorySpace.SMEM),   # lin_b
            pl.BlockSpec((Npad, TN), lambda j: (0, j)),          # adj    column block
        ],
        out_specs=pl.BlockSpec((Npad, TN), lambda j: (0, j)),    # lane-dense output block
        compiler_params=pltpu.CompilerParams(
            dimension_semantics=("parallel",),   # independent column blocks -> 2 TCs on v7x
            vmem_limit_bytes=32 * 1024 * 1024,
        ),
    )(xp, xtp, U, VT, lin_w.astype(jnp.float32), lin_b.astype(jnp.float32), adjp)

    return out[:N, :N]


def reference_forward(x, W, a_l, a_r, lin_w, lin_b, adj, alpha=0.2):
    """Pure-JAX reference mirroring the PyTorch module (unfolded math, explicit mask)."""
    b, n, s = x.shape
    xf = x.reshape(b * n, s)
    mask = jnp.where(adj == 0.0, jnp.float32(-1e9), jnp.float32(0.0))
    acc = 0.0
    for h in range(W.shape[0]):
        Hm = xf @ W[h]
        el = Hm @ a_l[h]
        er = Hm @ a_r[h]
        sc = el[:, None] + er[None, :]
        sc = jnp.where(sc >= 0, sc, alpha * sc)
        acc = acc + lin_w[h] * sc
    acc = acc + lin_b[0]
    att = adj * acc + mask
    return jax.nn.softmax(att, axis=0)


if __name__ == "__main__":
    # Keep the XLA reference / folding einsums in true f32 so the comparison is tight.
    jax.config.update("jax_default_matmul_precision", "highest")

    # Small, module-consistent shapes: x (b, n, s) with b*n == number of graph nodes N.
    B, NPB, S = 2, 8, 16          # -> N = 16 nodes, input_dim = 16
    OUT_DIM = 32
    HEADS = 4
    ALPHA = 0.2
    N = B * NPB

    key = jax.random.PRNGKey(0)
    k_x, k_w, k_a, k_lw, k_lb, k_adj = jax.random.split(key, 6)

    x = jax.random.normal(k_x, (B, NPB, S), dtype=jnp.float32)

    # Per-head parameters: xavier_normal_ with gain=1.414 (deterministic synthetic init).
    std_w = 1.414 * (2.0 / (S + OUT_DIM)) ** 0.5
    W = std_w * jax.random.normal(k_w, (HEADS, S, OUT_DIM), dtype=jnp.float32)
    std_a = 1.414 * (2.0 / (1 + 2 * OUT_DIM)) ** 0.5
    a_full = std_a * jax.random.normal(k_a, (HEADS, 2 * OUT_DIM), dtype=jnp.float32)
    a_l, a_r = a_full[:, :OUT_DIM], a_full[:, OUT_DIM:]

    # nn.Linear(head_n, 1) params (uniform init, deterministic).
    bound = 1.0 / (HEADS ** 0.5)
    lin_w = jax.random.uniform(k_lw, (HEADS,), jnp.float32, -bound, bound)
    lin_b = jax.random.uniform(k_lb, (1,), jnp.float32, -bound, bound)

    # Sparse adjacency (edge values == 1) with self loops, as a dense 0/1 matrix.
    adj = (jax.random.uniform(k_adj, (N, N), jnp.float32) < 0.3).astype(jnp.float32)
    adj = jnp.maximum(adj, jnp.eye(N, dtype=jnp.float32))

    out = multi_heads_gat_layer(x, W, a_l, a_r, lin_w, lin_b, adj, alpha=ALPHA)
    out = jax.block_until_ready(out)

    ref = reference_forward(x, W, a_l, a_r, lin_w, lin_b, adj, alpha=ALPHA)
    assert out.shape == (N, N)
    assert jnp.allclose(out, ref, atol=5e-5, rtol=1e-4), "mismatch vs JAX reference"

    print("KERNEL_OK")
</pallas_src>

<mosaic_0001>
module attributes {stable_mosaic.version = 11 : i64} {
  func.func @_gat_kernel(%arg0: i32, %arg1: memref<128x16xf32, #tpu.memory_space<vmem>>, %arg2: memref<16x128xf32, #tpu.memory_space<vmem>>, %arg3: memref<16x4xf32, #tpu.memory_space<vmem>>, %arg4: memref<4x16xf32, #tpu.memory_space<vmem>>, %arg5: memref<4xf32, #tpu.memory_space<smem>>, %arg6: memref<1xf32, #tpu.memory_space<smem>>, %arg7: memref<128x128xf32, #tpu.memory_space<vmem>>, %arg8: memref<128x128xf32, #tpu.memory_space<vmem>>) attributes {dimension_semantics = [#tpu.dimension_semantics<parallel>], iteration_bounds = array<i64: 1>, scalar_prefetch = 0 : i64, scratch_operands = 0 : i64, tpu.core_type = #tpu.core_type<tc>, window_params = [{pipeline_mode = #tpu.pipeline_mode<synchronous>, transform_indices = @transform_0, window_bounds = array<i64: 128, 16>}, {transform_indices = @transform_1, window_bounds = array<i64: 16, 128>}, {pipeline_mode = #tpu.pipeline_mode<synchronous>, transform_indices = @transform_2, window_bounds = array<i64: 16, 4>}, {pipeline_mode = #tpu.pipeline_mode<synchronous>, transform_indices = @transform_3, window_bounds = array<i64: 4, 16>}, {transform_indices = @transform_4, window_bounds = array<i64: 4>}, {transform_indices = @transform_5, window_bounds = array<i64: 1>}, {transform_indices = @transform_6, window_bounds = array<i64: 128, 128>}, {transform_indices = @transform_7, window_bounds = array<i64: 128, 128>}]} {
    %c0 = arith.constant 0 : index
    %c0_0 = arith.constant 0 : index
    %0 = vector.load %arg1[%c0, %c0_0] : memref<128x16xf32, #tpu.memory_space<vmem>>, vector<128x16xf32>
    %c0_1 = arith.constant 0 : index
    %c0_2 = arith.constant 0 : index
    %1 = vector.load %arg3[%c0_1, %c0_2] : memref<16x4xf32, #tpu.memory_space<vmem>>, vector<16x4xf32>
    %cst = arith.constant dense<0.000000e+00> : vector<128x4xf32>
    %2 = tpu.matmul %0, %1, %cst {dimension_numbers = #tpu.dot_dimension_numbers<[1], [0], [0], [1], [0, 0, 1, 1], [], []>, precision = #tpu.contract_precision<fp32>} : vector<128x16xf32>, vector<16x4xf32>, vector<128x4xf32> -> vector<128x4xf32>
    %c0_3 = arith.constant 0 : index
    %c0_4 = arith.constant 0 : index
    %3 = vector.load %arg4[%c0_3, %c0_4] : memref<4x16xf32, #tpu.memory_space<vmem>>, vector<4x16xf32>
    %c0_5 = arith.constant 0 : index
    %c0_6 = arith.constant 0 : index
    %4 = vector.load %arg2[%c0_5, %c0_6] : memref<16x128xf32, #tpu.memory_space<vmem>>, vector<16x128xf32>
    %cst_7 = arith.constant dense<0.000000e+00> : vector<4x128xf32>
    %5 = tpu.matmul %3, %4, %cst_7 {dimension_numbers = #tpu.dot_dimension_numbers<[1], [0], [0], [1], [0, 0, 1, 1], [], []>, precision = #tpu.contract_precision<fp32>} : vector<4x16xf32>, vector<16x128xf32>, vector<4x128xf32> -> vector<4x128xf32>
    %cst_8 = arith.constant 0.000000e+00 : f32
    %6 = vector.broadcast %cst_8 : f32 to vector<128x128xf32>
    %7 = vector.extract_strided_slice %2 {offsets = [0, 0], sizes = [128, 1], strides = [1, 1]} : vector<128x4xf32> to vector<128x1xf32>
    %8 = vector.extract_strided_slice %5 {offsets = [0, 0], sizes = [1, 128], strides = [1, 1]} : vector<4x128xf32> to vector<1x128xf32>
    %9 = vector.broadcast %7 : vector<128x1xf32> to vector<128x128xf32>
    %10 = vector.broadcast %8 : vector<1x128xf32> to vector<128x128xf32>
    %11 = arith.addf %9, %10 : vector<128x128xf32>
    %cst_9 = arith.constant 2.000000e-01 : f32
    %12 = vector.broadcast %cst_9 : f32 to vector<128x128xf32>
    %13 = arith.mulf %12, %11 : vector<128x128xf32>
    %14 = arith.maximumf %11, %13 : vector<128x128xf32>
    %c0_10 = arith.constant 0 : index
    %15 = memref.load %arg5[%c0_10] : memref<4xf32, #tpu.memory_space<smem>>
    %16 = vector.broadcast %15 : f32 to vector<128x128xf32>
    %17 = arith.mulf %16, %14 : vector<128x128xf32>
    %18 = arith.addf %6, %17 : vector<128x128xf32>
    %19 = vector.extract_strided_slice %2 {offsets = [0, 1], sizes = [128, 1], strides = [1, 1]} : vector<128x4xf32> to vector<128x1xf32>
    %20 = vector.extract_strided_slice %5 {offsets = [1, 0], sizes = [1, 128], strides = [1, 1]} : vector<4x128xf32> to vector<1x128xf32>
    %21 = vector.broadcast %19 : vector<128x1xf32> to vector<128x128xf32>
    %22 = vector.broadcast %20 : vector<1x128xf32> to vector<128x128xf32>
    %23 = arith.addf %21, %22 : vector<128x128xf32>
    %cst_11 = arith.constant 2.000000e-01 : f32
    %24 = vector.broadcast %cst_11 : f32 to vector<128x128xf32>
    %25 = arith.mulf %24, %23 : vector<128x128xf32>
    %26 = arith.maximumf %23, %25 : vector<128x128xf32>
    %c1 = arith.constant 1 : index
    %27 = memref.load %arg5[%c1] : memref<4xf32, #tpu.memory_space<smem>>
    %28 = vector.broadcast %27 : f32 to vector<128x128xf32>
    %29 = arith.mulf %28, %26 : vector<128x128xf32>
    %30 = arith.addf %18, %29 : vector<128x128xf32>
    %31 = vector.extract_strided_slice %2 {offsets = [0, 2], sizes = [128, 1], strides = [1, 1]} : vector<128x4xf32> to vector<128x1xf32>
    %32 = vector.extract_strided_slice %5 {offsets = [2, 0], sizes = [1, 128], strides = [1, 1]} : vector<4x128xf32> to vector<1x128xf32>
    %33 = vector.broadcast %31 : vector<128x1xf32> to vector<128x128xf32>
    %34 = vector.broadcast %32 : vector<1x128xf32> to vector<128x128xf32>
    %35 = arith.addf %33, %34 : vector<128x128xf32>
    %cst_12 = arith.constant 2.000000e-01 : f32
    %36 = vector.broadcast %cst_12 : f32 to vector<128x128xf32>
    %37 = arith.mulf %36, %35 : vector<128x128xf32>
    %38 = arith.maximumf %35, %37 : vector<128x128xf32>
    %c2 = arith.constant 2 : index
    %39 = memref.load %arg5[%c2] : memref<4xf32, #tpu.memory_space<smem>>
    %40 = vector.broadcast %39 : f32 to vector<128x128xf32>
    %41 = arith.mulf %40, %38 : vector<128x128xf32>
    %42 = arith.addf %30, %41 : vector<128x128xf32>
    %43 = vector.extract_strided_slice %2 {offsets = [0, 3], sizes = [128, 1], strides = [1, 1]} : vector<128x4xf32> to vector<128x1xf32>
    %44 = vector.extract_strided_slice %5 {offsets = [3, 0], sizes = [1, 128], strides = [1, 1]} : vector<4x128xf32> to vector<1x128xf32>
    %45 = vector.broadcast %43 : vector<128x1xf32> to vector<128x128xf32>
    %46 = vector.broadcast %44 : vector<1x128xf32> to vector<128x128xf32>
    %47 = arith.addf %45, %46 : vector<128x128xf32>
    %cst_13 = arith.constant 2.000000e-01 : f32
    %48 = vector.broadcast %cst_13 : f32 to vector<128x128xf32>
    %49 = arith.mulf %48, %47 : vector<128x128xf32>
    %50 = arith.maximumf %47, %49 : vector<128x128xf32>
    %c3 = arith.constant 3 : index
    %51 = memref.load %arg5[%c3] : memref<4xf32, #tpu.memory_space<smem>>
    %52 = vector.broadcast %51 : f32 to vector<128x128xf32>
    %53 = arith.mulf %52, %50 : vector<128x128xf32>
    %54 = arith.addf %42, %53 : vector<128x128xf32>
    %c0_14 = arith.constant 0 : index
    %55 = memref.load %arg6[%c0_14] : memref<1xf32, #tpu.memory_space<smem>>
    %56 = vector.broadcast %55 : f32 to vector<128x128xf32>
    %57 = arith.addf %54, %56 : vector<128x128xf32>
    %c0_15 = arith.constant 0 : index
    %c0_16 = arith.constant 0 : index
    %58 = vector.load %arg7[%c0_15, %c0_16] : memref<128x128xf32, #tpu.memory_space<vmem>>, vector<128x128xf32>
    %cst_17 = arith.constant 0.000000e+00 : f32
    %59 = vector.broadcast %cst_17 : f32 to vector<128x128xf32>
    %60 = arith.cmpf one, %58, %59 : vector<128x128xf32>
    %61 = arith.mulf %58, %57 : vector<128x128xf32>
    %cst_18 = arith.constant -1.000000e+09 : f32
    %62 = vector.broadcast %cst_18 : f32 to vector<128x128xf32>
    %63 = arith.select %60, %61, %62 : vector<128x128xi1>, vector<128x128xf32>
    %cst_19 = arith.constant dense<0xFF800000> : vector<128xf32>
    %64 = vector.multi_reduction <maximumf>, %63, %cst_19 [0] : vector<128x128xf32> to vector<128xf32>
    %65 = vector.shape_cast %64 : vector<128xf32> to vector<1x128xf32>
    %66 = vector.broadcast %65 : vector<1x128xf32> to vector<128x128xf32>
    %67 = arith.subf %63, %66 : vector<128x128xf32>
    %68 = math.exp %67 : vector<128x128xf32>
    %cst_20 = arith.constant dense<0.000000e+00> : vector<128xf32>
    %69 = vector.multi_reduction <add>, %68, %cst_20 [0] : vector<128x128xf32> to vector<128xf32>
    %70 = vector.shape_cast %69 : vector<128xf32> to vector<1x128xf32>
    %71 = tpu.reciprocal %70 {approx = true} : vector<1x128xf32> -> vector<1x128xf32>
    %72 = arith.mulf %70, %71 : vector<1x128xf32>
    %cst_21 = arith.constant 2.000000e+00 : f32
    %73 = vector.broadcast %cst_21 : f32 to vector<1x128xf32>
    %74 = arith.subf %73, %72 : vector<1x128xf32>
    %75 = arith.mulf %71, %74 : vector<1x128xf32>
    %76 = vector.broadcast %75 : vector<1x128xf32> to vector<128x128xf32>
    %77 = arith.mulf %68, %76 : vector<128x128xf32>
    %c0_22 = arith.constant 0 : index
    %c0_23 = arith.constant 0 : index
    %78 = vector.load %arg8[%c0_22, %c0_23] : memref<128x128xf32, #tpu.memory_space<vmem>>, vector<128x128xf32>
    tpu.vector_store %arg8[%c0_22, %c0_23], %77 {strides = array<i32>} : memref<128x128xf32, #tpu.memory_space<vmem>>, vector<128x128xf32>,
    return
  }
  func.func @transform_0(%arg0: i32) -> (i32, i32) {
    %c0_i32 = arith.constant 0 : i32
    %c0_i32_0 = arith.constant 0 : i32
    %c0_i32_1 = arith.constant 0 : i32
    return %c0_i32, %c0_i32_0 : i32, i32
  }
  func.func @transform_1(%arg0: i32) -> (i32, i32) {
    %c0_i32 = arith.constant 0 : i32
    %c0_i32_0 = arith.constant 0 : i32
    return %c0_i32, %arg0 : i32, i32
  }
  func.func @transform_2(%arg0: i32) -> (i32, i32) {
    %c0_i32 = arith.constant 0 : i32
    %c0_i32_0 = arith.constant 0 : i32
    %c0_i32_1 = arith.constant 0 : i32
    return %c0_i32, %c0_i32_0 : i32, i32
  }
  func.func @transform_3(%arg0: i32) -> (i32, i32) {
    %c0_i32 = arith.constant 0 : i32
    %c0_i32_0 = arith.constant 0 : i32
    %c0_i32_1 = arith.constant 0 : i32
    return %c0_i32, %c0_i32_0 : i32, i32
  }
  func.func @transform_4(%arg0: i32) -> i32 {
    %c0_i32 = arith.constant 0 : i32
    %c0_i32_0 = arith.constant 0 : i32
    return %c0_i32 : i32
  }
  func.func @transform_5(%arg0: i32) -> i32 {
    %c0_i32 = arith.constant 0 : i32
    %c0_i32_0 = arith.constant 0 : i32
    return %c0_i32 : i32
  }
  func.func @transform_6(%arg0: i32) -> (i32, i32) {
    %c0_i32 = arith.constant 0 : i32
    %c0_i32_0 = arith.constant 0 : i32
    return %c0_i32, %arg0 : i32, i32
  }
  func.func @transform_7(%arg0: i32) -> (i32, i32) {
    %c0_i32 = arith.constant 0 : i32
    %c0_i32_0 = arith.constant 0 : i32
    return %c0_i32, %arg0 : i32, i32
  }
}

</mosaic_0001>

<llo_original>
// kernel: tpu_custom_call.1
$region0: #{tpu_custom_call.1}
  #allocation0 [shape = 'u32[]', space=smem, size = 0x4, offset = 0x4, fixed_abs, tag = 'smem constant byte address 0x4 - core index']
  #allocation1 [shape = 'u32[144,128]{1,0:T(1,128)}', space=vmem, size = 0x12000, scoped, tag = 'internal scratch']
  #allocation2 [shape = 'f32[1]{0:T(128)S(6)}', space=smem, size = 0x200, scoped, tag = 'scoped memory for tpu_custom_call.1']
  %s0 = inlined_call_operand.vmem [shape: f32[128,16], index: 0, kind: input, shape index: {}]
  %s1 = inlined_call_operand.vmem [shape: f32[16,128], index: 1, kind: input, shape index: {}]
  %s2 = inlined_call_operand.vmem [shape: f32[16,4], index: 2, kind: input, shape index: {}]
  %s3 = inlined_call_operand.vmem [shape: f32[4,16], index: 3, kind: input, shape index: {}]
  %s4 = inlined_call_operand.vmem [shape: f32[4], index: 4, kind: input, shape index: {}]
  %s5 = inlined_call_operand.<no memory space> [shape: f32[1], index: 5, kind: input, shape index: {}]
  %s6 = inlined_call_operand.vmem [shape: f32[128,128], index: 6, kind: input, shape index: {}]
  %s7 = inlined_call_operand.hbm [shape: f32[128,128], index: 7, kind: output, shape index: {}]
  %s8 = sld [smem:[#allocation0]]
  $region42: #{tpu_custom_call.1} parent=0
    _
  %s10 = ssub.s32 1, %s8
  %s11 = scalar_select 0, %s10, %s8
  %12 = sst [smem:[#allocation2]] %s5
  $region1: #{tpu_custom_call.1} parent=0
    #allocation3 [shape = 'u8[512]{0}', space=smem, size = 0x200, scoped, tag = 'input window, operand 4, single buffered']
    #allocation4 [shape = 's32[1]{0}', space=sflag, size = 0x4, scoped, tag = 'scoped memory for tpu_custom_call.1']
    #allocation5 [shape = 's32[1]{0}', space=sflag, size = 0x4, scoped, tag = 'scoped memory for tpu_custom_call.1']
    #allocation6 [shape = 'u8[65536]{0}', space=vmem, size = 0x10000, scoped, tag = 'output window, operand 0, single buffered']
    %13 = vsyncpa [#allocation5], 0
    %14 = vsyncpa [#allocation4], 0
    // Predicated region
    $region2: #{tpu_custom_call.1} parent=1 // pred_check
      _
    $region3: #{tpu_custom_call.1} parent=1 // pred_check_branch
      %16 = sbr.rel (0) target = $region5
    $region4: #{tpu_custom_call.1} parent=1 // pred_region
      _
    $region5: #{tpu_custom_call.1} parent=1 // pred_fallthru
      _
    // Predicated region
    $region6: #{tpu_custom_call.1} parent=1 // pred_check
      _
    $region7: #{tpu_custom_call.1} parent=1 // pred_check_branch
      %18 = sbr.rel (0) target = $region9
    $region8: #{tpu_custom_call.1} parent=1 // pred_region
      _
    $region9: #{tpu_custom_call.1} parent=1 // pred_fallthru
      _
    // Predicated region
    $region10: #{tpu_custom_call.1} parent=1 // pred_check
      _
    $region11: #{tpu_custom_call.1} parent=1 // pred_check_branch
      %20 = sbr.rel (0) target = $region13
    $region12: #{tpu_custom_call.1} parent=1 // pred_region
      _
    $region13: #{tpu_custom_call.1} parent=1 // pred_fallthru
      _
    // Predicated region
    $region14: #{tpu_custom_call.1} parent=1 // pred_check
      _
    $region15: #{tpu_custom_call.1} parent=1 // pred_check_branch
      %22 = sbr.rel (0) target = $region17
    $region16: #{tpu_custom_call.1} parent=1 // pred_region
      _
    $region17: #{tpu_custom_call.1} parent=1 // pred_fallthru
      _
    // Predicated region
    $region18: #{tpu_custom_call.1} parent=1 // pred_check
      _
    $region19: #{tpu_custom_call.1} parent=1 // pred_check_branch
      %24 = sbr.rel (0) target = $region21
    $region20: #{tpu_custom_call.1} parent=1 // pred_region
      %s26 = ssub.s32 16, 16
      %27 = vsyncadd [#allocation5], %s26
      %s29 = sshll.u32 %s4, 4
      %s30 = int_to_ptr.vmem [resolvable:$true] %s29
      %32 = dma.vmem_to_smem %s30, 16, [#allocation3], [#allocation5]
    $region21: #{tpu_custom_call.1} parent=1 // pred_fallthru
      _
    // Predicated region
    $region22: #{tpu_custom_call.1} parent=1 // pred_check
      _
    $region23: #{tpu_custom_call.1} parent=1 // pred_check_branch
      %34 = sbr.rel (0) target = $region25
    $region24: #{tpu_custom_call.1} parent=1 // pred_region
      _
    $region25: #{tpu_custom_call.1} parent=1 // pred_fallthru
      _
    // Predicated region
    $region26: #{tpu_custom_call.1} parent=1 // pred_check
      _
    $region27: #{tpu_custom_call.1} parent=1 // pred_check_branch
      %36 = sbr.rel (0) target = $region29
    $region28: #{tpu_custom_call.1} parent=1 // pred_region
      _
    $region29: #{tpu_custom_call.1} parent=1 // pred_fallthru
      _
    // Predicated region
    $region30: #{tpu_custom_call.1} parent=1 // pred_check
      _
    $region31: #{tpu_custom_call.1} parent=1 // pred_check_branch
      %38 = sbr.rel (0) target = $region33
    $region32: #{tpu_custom_call.1} parent=1 // pred_region
      %39 = dma.done [#allocation5], 16
    $region33: #{tpu_custom_call.1} parent=1 // pred_fallthru
      _
    %40 = sfence
    %v41 = vld [vmem:[%s0] sm:$0xff]
    %v42 = vld [vmem:[%s0 + $0x8] sm:$0xff]
    %v43 = vld [vmem:[%s0 + $0x10] sm:$0xff]
    %v44 = vld [vmem:[%s0 + $0x18] sm:$0xff]
    %v45 = vld [vmem:[%s0 + $0x20] sm:$0xff]
    %v46 = vld [vmem:[%s0 + $0x28] sm:$0xff]
    %v47 = vld [vmem:[%s0 + $0x30] sm:$0xff]
    %v48 = vld [vmem:[%s0 + $0x38] sm:$0xff]
    %v49 = vld [vmem:[%s0 + $0x40] sm:$0xff]
    %v50 = vld [vmem:[%s0 + $0x48] sm:$0xff]
    %v51 = vld [vmem:[%s0 + $0x50] sm:$0xff]
    %v52 = vld [vmem:[%s0 + $0x58] sm:$0xff]
    %v53 = vld [vmem:[%s0 + $0x60] sm:$0xff]
    %v54 = vld [vmem:[%s0 + $0x68] sm:$0xff]
    %v55 = vld [vmem:[%s0 + $0x70] sm:$0xff]
    %v56 = vld [vmem:[%s0 + $0x78] sm:$0xff]
    %v57 = vld [vmem:[%s2] sm:$0xff]
    %v58 = vld [vmem:[%s2 + $0x8] sm:$0xff]
    %vm59 = vcmask 130048
    %v61 = vsel %vm59, %v41, 0
    %v64 = vsel %vm59, %v42, 0
    %v67 = vsel %vm59, %v43, 0
    %v70 = vsel %vm59, %v44, 0
    %v73 = vsel %vm59, %v45, 0
    %v76 = vsel %vm59, %v46, 0
    %v79 = vsel %vm59, %v47, 0
    %v82 = vsel %vm59, %v48, 0
    %v85 = vsel %vm59, %v49, 0
    %v88 = vsel %vm59, %v50, 0
    %v91 = vsel %vm59, %v51, 0
    %v94 = vsel %vm59, %v52, 0
    %v97 = vsel %vm59, %v53, 0
    %v100 = vsel %vm59, %v54, 0
    %v103 = vsel %vm59, %v55, 0
    %v106 = vsel %vm59, %v56, 0
    %108 = vmatprep.subr.mxu0 0.0
    %v109 = vand.u32 %v57, 4294901760
    %110 = vmatpush1.msra.mxu0 %v109
    %111 = vmatprep.subr.mxu0 0.0
    %v112 = vand.u32 %v58, 4294901760
    %113 = vmatpush1.msra.mxu0 %v112
    %114 = vmatprep.subr.mxu0 0.0
    %115 = vmatpush1.msra.mxu0 0.0
    %116 = vmatprep.subr.mxu0 0.0
    %117 = vmatpush1.msra.mxu0 0.0
    %118 = vmatprep.subr.mxu0 0.0
    %119 = vmatpush1.msra.mxu0 0.0
    %120 = vmatprep.subr.mxu0 0.0
    %121 = vmatpush1.msra.mxu0 0.0
    %122 = vmatprep.subr.mxu0 0.0
    %123 = vmatpush1.msra.mxu0 0.0
    %124 = vmatprep.subr.mxu0 0.0
    %125 = vmatpush1.msra.mxu0 0.0
    %126 = vmatprep.subr.mxu0 0.0
    %127 = vmatpush1.msra.mxu0 0.0
    %128 = vmatprep.subr.mxu0 0.0
    %129 = vmatpush1.msra.mxu0 0.0
    %130 = vmatprep.subr.mxu0 0.0
    %131 = vmatpush1.msra.mxu0 0.0
    %132 = vmatprep.subr.mxu0 0.0
    %133 = vmatpush1.msra.mxu0 0.0
    %134 = vmatprep.subr.mxu0 0.0
    %135 = vmatpush1.msra.mxu0 0.0
    %136 = vmatprep.subr.mxu0 0.0
    %137 = vmatpush1.msra.mxu0 0.0
    %138 = vmatprep.subr.mxu0 0.0
    %139 = vmatpush1.msra.mxu0 0.0
    %140 = vmatprep.subr.mxu0 0.0
    %141 = vmatpush1.msra.mxu0 0.0
    %142 = vmatprep.subr.mxu0 0.0
    %143 = vmatpush1.msra.mxu0 0.0
    %144 = vmatprep.subr.mxu0 0.0
    %145 = vmatpush1.msra.mxu0 0.0
    %146 = vmatprep.subr.mxu0 0.0
    %147 = vmatpush1.msra.mxu0 0.0
    %148 = vmatprep.subr.mxu0 0.0
    %149 = vmatpush1.msra.mxu0 0.0
    %150 = vmatprep.subr.mxu0 0.0
    %151 = vmatpush1.msra.mxu0 0.0
    %152 = vmatprep.subr.mxu0 0.0
    %153 = vmatpush1.msra.mxu0 0.0
    %154 = vmatprep.subr.mxu0 0.0
    %155 = vmatpush1.msra.mxu0 0.0
    %156 = vmatprep.subr.mxu0 0.0
    %157 = vmatpush1.msra.mxu0 0.0
    %158 = vmatprep.subr.mxu0 0.0
    %159 = vmatpush1.msra.mxu0 0.0
    %160 = vmatprep.subr.mxu0 0.0
    %161 = vmatpush1.msra.mxu0 0.0
    %162 = vmatprep.subr.mxu0 0.0
    %163 = vmatpush1.msra.mxu0 0.0
    %164 = vmatprep.subr.mxu0 0.0
    %165 = vmatpush1.msra.mxu0 0.0
    %166 = vmatprep.subr.mxu0 0.0
    %167 = vmatpush1.msra.mxu0 0.0
    %168 = vmatprep.subr.mxu0 0.0
    %169 = vmatpush1.msra.mxu0 0.0
    %170 = vmatprep.subr.mxu0 0.0
    %171 = vmatpush1.msra.mxu0 0.0
    %172 = vmatprep.subr.mxu0 0.0
    %173 = vmatpush1.msra.mxu0 0.0
    %174 = vmatprep.mubr.f32.mxu0 0.0
    %v175 = vand.u32 %v61, 4294901760
    %v176 = vsub.f32 %v61, %v175
    %v177 = vand.u32 %v176, 4294901760
    %v178 = vsub.f32 %v176, %v177
    %v179 = vand.u32 %v178, 4294901760
    %180 = vmatmul.mubr.f32.gmra.mrb[0].mxu0 %v179
    %v181 = vpop.f32.mrb[0].mxu0
    %v182 = vadd.f32 0.0, %v181
    %v183 = vpop.f32.mrb[0].mxu0
    %184 = vmatprep.mubr.f32.mxu0 0.0
    %v185 = vand.u32 %v64, 4294901760
    %v186 = vsub.f32 %v64, %v185
    %v187 = vand.u32 %v186, 4294901760
    %v188 = vsub.f32 %v186, %v187
    %v189 = vand.u32 %v188, 4294901760
    %190 = vmatmul.mubr.f32.gmra.mrb[0].mxu0 %v189
    %v191 = vpop.f32.mrb[0].mxu0
    %v192 = vadd.f32 0.0, %v191
    %v193 = vpop.f32.mrb[0].mxu0
    %194 = vmatprep.mubr.f32.mxu0 0.0
    %v195 = vand.u32 %v67, 4294901760
    %v196 = vsub.f32 %v67, %v195
    %v197 = vand.u32 %v196, 4294901760
    %v198 = vsub.f32 %v196, %v197
    %v199 = vand.u32 %v198, 4294901760
    %200 = vmatmul.mubr.f32.gmra.mrb[0].mxu0 %v199
    %v201 = vpop.f32.mrb[0].mxu0
    %v202 = vadd.f32 0.0, %v201
    %v203 = vpop.f32.mrb[0].mxu0
    %204 = vmatprep.mubr.f32.mxu0 0.0
    %v205 = vand.u32 %v70, 4294901760
    %v206 = vsub.f32 %v70, %v205
    %v207 = vand.u32 %v206, 4294901760
    %v208 = vsub.f32 %v206, %v207
    %v209 = vand.u32 %v208, 4294901760
    %210 = vmatmul.mubr.f32.gmra.mrb[0].mxu0 %v209
    %v211 = vpop.f32.mrb[0].mxu0
    %v212 = vadd.f32 0.0, %v211
    %v213 = vpop.f32.mrb[0].mxu0
    %214 = vmatprep.mubr.f32.mxu0 0.0
    %v215 = vand.u32 %v73, 4294901760
    %v216 = vsub.f32 %v73, %v215
    %v217 = vand.u32 %v216, 4294901760
    %v218 = vsub.f32 %v216, %v217
    %v219 = vand.u32 %v218, 4294901760
    %220 = vmatmul.mubr.f32.gmra.mrb[0].mxu0 %v219
    %v221 = vpop.f32.mrb[0].mxu0
    %v222 = vadd.f32 0.0, %v221
    %v223 = vpop.f32.mrb[0].mxu0
    %224 = vmatprep.mubr.f32.mxu0 0.0
    %v225 = vand.u32 %v76, 4294901760
    %v226 = vsub.f32 %v76, %v225
    %v227 = vand.u32 %v226, 4294901760
    %v228 = vsub.f32 %v226, %v227
    %v229 = vand.u32 %v228, 4294901760
    %230 = vmatmul.mubr.f32.gmra.mrb[0].mxu0 %v229
    %v231 = vpop.f32.mrb[0].mxu0
    %v232 = vadd.f32 0.0, %v231
    %v233 = vpop.f32.mrb[0].mxu0
    %234 = vmatprep.mubr.f32.mxu0 0.0
    %v235 = vand.u32 %v79, 4294901760
    %v236 = vsub.f32 %v79, %v235
    %v237 = vand.u32 %v236, 4294901760
    %v238 = vsub.f32 %v236, %v237
    %v239 = vand.u32 %v238, 4294901760
    %240 = vmatmul.mubr.f32.gmra.mrb[0].mxu0 %v239
    %v241 = vpop.f32.mrb[0].mxu0
    %v242 = vadd.f32 0.0, %v241
    %v243 = vpop.f32.mrb[0].mxu0
    %244 = vmatprep.mubr.f32.mxu0 0.0
    %v245 = vand.u32 %v82, 4294901760
    %v246 = vsub.f32 %v82, %v245
    %v247 = vand.u32 %v246, 4294901760
    %v248 = vsub.f32 %v246, %v247
    %v249 = vand.u32 %v248, 4294901760
    %250 = vmatmul.mubr.f32.gmra.mrb[0].mxu0 %v249
    %v251 = vpop.f32.mrb[0].mxu0
    %v252 = vadd.f32 0.0, %v251
    %v253 = vpop.f32.mrb[0].mxu0
    %254 = vmatprep.mubr.f32.mxu0 0.0
    %v255 = vand.u32 %v85, 4294901760
    %v256 = vsub.f32 %v85, %v255
    %v257 = vand.u32 %v256, 4294901760
    %v258 = vsub.f32 %v256, %v257
    %v259 = vand.u32 %v258, 4294901760
    %260 = vmatmul.mubr.f32.gmra.mrb[0].mxu0 %v259
    %v261 = vpop.f32.mrb[0].mxu0
    %v262 = vadd.f32 0.0, %v261
    %v263 = vpop.f32.mrb[0].mxu0
    %264 = vmatprep.mubr.f32.mxu0 0.0
    %v265 = vand.u32 %v88, 4294901760
    %v266 = vsub.f32 %v88, %v265
    %v267 = vand.u32 %v266, 4294901760
    %v268 = vsub.f32 %v266, %v267
    %v269 = vand.u32 %v268, 4294901760
    %270 = vmatmul.mubr.f32.gmra.mrb[0].mxu0 %v269
    %v271 = vpop.f32.mrb[0].mxu0
    %v272 = vadd.f32 0.0, %v271
    %v273 = vpop.f32.mrb[0].mxu0
    %274 = vmatprep.mubr.f32.mxu0 0.0
    %v275 = vand.u32 %v91, 4294901760
    %v276 = vsub.f32 %v91, %v275
    %v277 = vand.u32 %v276, 4294901760
    %v278 = vsub.f32 %v276, %v277
    %v279 = vand.u32 %v278, 4294901760
    %280 = vmatmul.mubr.f32.gmra.mrb[0].mxu0 %v279
    %v281 = vpop.f32.mrb[0].mxu0
    %v282 = vadd.f32 0.0, %v281
    %v283 = vpop.f32.mrb[0].mxu0
    %284 = vmatprep.mubr.f32.mxu0 0.0
    %v285 = vand.u32 %v94, 4294901760
    %v286 = vsub.f32 %v94, %v285
    %v287 = vand.u32 %v286, 4294901760
    %v288 = vsub.f32 %v286, %v287
    %v289 = vand.u32 %v288, 4294901760
    %290 = vmatmul.mubr.f32.gmra.mrb[0].mxu0 %v289
    %v291 = vpop.f32.mrb[0].mxu0
    %v292 = vadd.f32 0.0, %v291
    %v293 = vpop.f32.mrb[0].mxu0
    %294 = vmatprep.mubr.f32.mxu0 0.0
    %v295 = vand.u32 %v97, 4294901760
    %v296 = vsub.f32 %v97, %v295
    %v297 = vand.u32 %v296, 4294901760
    %v298 = vsub.f32 %v296, %v297
    %v299 = vand.u32 %v298, 4294901760
    %300 = vmatmul.mubr.f32.gmra.mrb[0].mxu0 %v299
    %v301 = vpop.f32.mrb[0].mxu0
    %v302 = vadd.f32 0.0, %v301
    %v303 = vpop.f32.mrb[0].mxu0
    %304 = vmatprep.mubr.f32.mxu0 0.0
    %v305 = vand.u32 %v100, 4294901760
    %v306 = vsub.f32 %v100, %v305
    %v307 = vand.u32 %v306, 4294901760
    %v308 = vsub.f32 %v306, %v307
    %v309 = vand.u32 %v308, 4294901760
    %310 = vmatmul.mubr.f32.gmra.mrb[0].mxu0 %v309
    %v311 = vpop.f32.mrb[0].mxu0
    %v312 = vadd.f32 0.0, %v311
    %v313 = vpop.f32.mrb[0].mxu0
    %314 = vmatprep.mubr.f32.mxu0 0.0
    %v315 = vand.u32 %v103, 4294901760
    %v316 = vsub.f32 %v103, %v315
    %v317 = vand.u32 %v316, 4294901760
    %v318 = vsub.f32 %v316, %v317
    %v319 = vand.u32 %v318, 4294901760
    %320 = vmatmul.mubr.f32.gmra.mrb[0].mxu0 %v319
    %v321 = vpop.f32.mrb[0].mxu0
    %v322 = vadd.f32 0.0, %v321
    %v323 = vpop.f32.mrb[0].mxu0
    %324 = vmatprep.mubr.f32.mxu0 0.0
    %v325 = vand.u32 %v106, 4294901760
    %v326 = vsub.f32 %v106, %v325
    %v327 = vand.u32 %v326, 4294901760
    %v328 = vsub.f32 %v326, %v327
    %v329 = vand.u32 %v328, 4294901760
    %330 = vmatmul.mubr.f32.gmra.mrb[0].mxu0 %v329
    %v331 = vpop.f32.mrb[0].mxu0
    %v332 = vadd.f32 0.0, %v331
    %v333 = vpop.f32.mrb[0].mxu0
    %334 = vdwg.mxu0
    %335 = vmatprep.subr.mxu0 0.0
    %v336 = vand.u32 %v57, 4294901760
    %v337 = vsub.f32 %v57, %v336
    %v338 = vand.u32 %v337, 4294901760
    %v339 = vsub.f32 %v337, %v338
    %v340 = vand.u32 %v339, 4294901760
    %341 = vmatpush1.msra.mxu0 %v340
    %342 = vmatprep.subr.mxu0 0.0
    %v343 = vand.u32 %v58, 4294901760
    %v344 = vsub.f32 %v58, %v343
    %v345 = vand.u32 %v344, 4294901760
    %v346 = vsub.f32 %v344, %v345
    %v347 = vand.u32 %v346, 4294901760
    %348 = vmatpush1.msra.mxu0 %v347
    %349 = vmatprep.subr.mxu0 0.0
    %350 = vmatpush1.msra.mxu0 0.0
    %351 = vmatprep.subr.mxu0 0.0
    %352 = vmatpush1.msra.mxu0 0.0
    %353 = vmatprep.subr.mxu0 0.0
    %354 = vmatpush1.msra.mxu0 0.0
    %355 = vmatprep.subr.mxu0 0.0
    %356 = vmatpush1.msra.mxu0 0.0
    %357 = vmatprep.subr.mxu0 0.0
    %358 = vmatpush1.msra.mxu0 0.0
    %359 = vmatprep.subr.mxu0 0.0
    %360 = vmatpush1.msra.mxu0 0.0
    %361 = vmatprep.subr.mxu0 0.0
    %362 = vmatpush1.msra.mxu0 0.0
    %363 = vmatprep.subr.mxu0 0.0
    %364 = vmatpush1.msra.mxu0 0.0
    %365 = vmatprep.subr.mxu0 0.0
    %366 = vmatpush1.msra.mxu0 0.0
    %367 = vmatprep.subr.mxu0 0.0
    %368 = vmatpush1.msra.mxu0 0.0
    %369 = vmatprep.subr.mxu0 0.0
    %370 = vmatpush1.msra.mxu0 0.0
    %371 = vmatprep.subr.mxu0 0.0
    %372 = vmatpush1.msra.mxu0 0.0
    %373 = vmatprep.subr.mxu0 0.0
    %374 = vmatpush1.msra.mxu0 0.0
    %375 = vmatprep.subr.mxu0 0.0
    %376 = vmatpush1.msra.mxu0 0.0
    %377 = vmatprep.subr.mxu0 0.0
    %378 = vmatpush1.msra.mxu0 0.0
    %379 = vmatprep.subr.mxu0 0.0
    %380 = vmatpush1.msra.mxu0 0.0
    %381 = vmatprep.subr.mxu0 0.0
    %382 = vmatpush1.msra.mxu0 0.0
    %383 = vmatprep.subr.mxu0 0.0
    %384 = vmatpush1.msra.mxu0 0.0
    %385 = vmatprep.subr.mxu0 0.0
    %386 = vmatpush1.msra.mxu0 0.0
    %387 = vmatprep.subr.mxu0 0.0
    %388 = vmatpush1.msra.mxu0 0.0
    %389 = vmatprep.subr.mxu0 0.0
    %390 = vmatpush1.msra.mxu0 0.0
    %391 = vmatprep.subr.mxu0 0.0
    %392 = vmatpush1.msra.mxu0 0.0
    %393 = vmatprep.subr.mxu0 0.0
    %394 = vmatpush1.msra.mxu0 0.0
    %395 = vmatprep.subr.mxu0 0.0
    %396 = vmatpush1.msra.mxu0 0.0
    %397 = vmatprep.subr.mxu0 0.0
    %398 = vmatpush1.msra.mxu0 0.0
    %399 = vmatprep.subr.mxu0 0.0
    %400 = vmatpush1.msra.mxu0 0.0
    %401 = vmatprep.subr.mxu0 0.0
    %402 = vmatpush1.msra.mxu0 0.0
    %403 = vmatprep.subr.mxu0 0.0
    %404 = vmatpush1.msra.mxu0 0.0
    %405 = vmatprep.subr.mxu0 0.0
    %406 = vmatpush1.msra.mxu0 0.0
    %407 = vmatprep.subr.mxu0 0.0
    %408 = vmatpush1.msra.mxu0 0.0
    %409 = vmatprep.mubr.f32.mxu0 0.0
    %v410 = vand.u32 %v61, 4294901760
    %411 = vmatmul.mubr.f32.gmra.mrb[0].mxu0 %v410
    %v412 = vpop.f32.mrb[0].mxu0
    %v413 = vadd.f32 %v182, %v412
    %v414 = vpop.f32.mrb[0].mxu0
    %415 = vmatprep.mubr.f32.mxu0 0.0
    %v416 = vand.u32 %v64, 4294901760
    %417 = vmatmul.mubr.f32.gmra.mrb[0].mxu0 %v416
    %v418 = vpop.f32.mrb[0].mxu0
    %v419 = vadd.f32 %v192, %v418
    %v420 = vpop.f32.mrb[0].mxu0
    %421 = vmatprep.mubr.f32.mxu0 0.0
    %v422 = vand.u32 %v67, 4294901760
    %423 = vmatmul.mubr.f32.gmra.mrb[0].mxu0 %v422
    %v424 = vpop.f32.mrb[0].mxu0
    %v425 = vadd.f32 %v202, %v424
    %v426 = vpop.f32.mrb[0].mxu0
    %427 = vmatprep.mubr.f32.mxu0 0.0
    %v428 = vand.u32 %v70, 4294901760
    %429 = vmatmul.mubr.f32.gmra.mrb[0].mxu0 %v428
    %v430 = vpop.f32.mrb[0].mxu0
    %v431 = vadd.f32 %v212, %v430
    %v432 = vpop.f32.mrb[0].mxu0
    %433 = vmatprep.mubr.f32.mxu0 0.0
    %v434 = vand.u32 %v73, 4294901760
    %435 = vmatmul.mubr.f32.gmra.mrb[0].mxu0 %v434
    %v436 = vpop.f32.mrb[0].mxu0
    %v437 = vadd.f32 %v222, %v436
    %v438 = vpop.f32.mrb[0].mxu0
    %439 = vmatprep.mubr.f32.mxu0 0.0
    %v440 = vand.u32 %v76, 4294901760
    %441 = vmatmul.mubr.f32.gmra.mrb[0].mxu0 %v440
    %v442 = vpop.f32.mrb[0].mxu0
    %v443 = vadd.f32 %v232, %v442
    %v444 = vpop.f32.mrb[0].mxu0
    %445 = vmatprep.mubr.f32.mxu0 0.0
    %v446 = vand.u32 %v79, 4294901760
    %447 = vmatmul.mubr.f32.gmra.mrb[0].mxu0 %v446
    %v448 = vpop.f32.mrb[0].mxu0
    %v449 = vadd.f32 %v242, %v448
    %v450 = vpop.f32.mrb[0].mxu0
    %451 = vmatprep.mubr.f32.mxu0 0.0
    %v452 = vand.u32 %v82, 4294901760
    %453 = vmatmul.mubr.f32.gmra.mrb[0].mxu0 %v452
    %v454 = vpop.f32.mrb[0].mxu0
    %v455 = vadd.f32 %v252, %v454
    %v456 = vpop.f32.mrb[0].mxu0
    %457 = vmatprep.mubr.f32.mxu0 0.0
    %v458 = vand.u32 %v85, 4294901760
    %459 = vmatmul.mubr.f32.gmra.mrb[0].mxu0 %v458
    %v460 = vpop.f32.mrb[0].mxu0
    %v461 = vadd.f32 %v262, %v460
    %v462 = vpop.f32.mrb[0].mxu0
    %463 = vmatprep.mubr.f32.mxu0 0.0
    %v464 = vand.u32 %v88, 4294901760
    %465 = vmatmul.mubr.f32.gmra.mrb[0].mxu0 %v464
    %v466 = vpop.f32.mrb[0].mxu0
    %v467 = vadd.f32 %v272, %v466
    %v468 = vpop.f32.mrb[0].mxu0
    %469 = vmatprep.mubr.f32.mxu0 0.0
    %v470 = vand.u32 %v91, 4294901760
    %471 = vmatmul.mubr.f32.gmra.mrb[0].mxu0 %v470
    %v472 = vpop.f32.mrb[0].mxu0
    %v473 = vadd.f32 %v282, %v472
    %v474 = vpop.f32.mrb[0].mxu0
    %475 = vmatprep.mubr.f32.mxu0 0.0
    %v476 = vand.u32 %v94, 4294901760
    %477 = vmatmul.mubr.f32.gmra.mrb[0].mxu0 %v476
    %v478 = vpop.f32.mrb[0].mxu0
    %v479 = vadd.f32 %v292, %v478
    %v480 = vpop.f32.mrb[0].mxu0
    %481 = vmatprep.mubr.f32.mxu0 0.0
    %v482 = vand.u32 %v97, 4294901760
    %483 = vmatmul.mubr.f32.gmra.mrb[0].mxu0 %v482
    %v484 = vpop.f32.mrb[0].mxu0
    %v485 = vadd.f32 %v302, %v484
    %v486 = vpop.f32.mrb[0].mxu0
    %487 = vmatprep.mubr.f32.mxu0 0.0
    %v488 = vand.u32 %v100, 4294901760
    %489 = vmatmul.mubr.f32.gmra.mrb[0].mxu0 %v488
    %v490 = vpop.f32.mrb[0].mxu0
    %v491 = vadd.f32 %v312, %v490
    %v492 = vpop.f32.mrb[0].mxu0
    %493 = vmatprep.mubr.f32.mxu0 0.0
    %v494 = vand.u32 %v103, 4294901760
    %495 = vmatmul.mubr.f32.gmra.mrb[0].mxu0 %v494
    %v496 = vpop.f32.mrb[0].mxu0
    %v497 = vadd.f32 %v322, %v496
    %v498 = vpop.f32.mrb[0].mxu0
    %499 = vmatprep.mubr.f32.mxu0 0.0
    %v500 = vand.u32 %v106, 4294901760
    %501 = vmatmul.mubr.f32.gmra.mrb[0].mxu0 %v500
    %v502 = vpop.f32.mrb[0].mxu0
    %v503 = vadd.f32 %v332, %v502
    %v504 = vpop.f32.mrb[0].mxu0
    %505 = vdwg.mxu0
    %506 = vmatprep.subr.mxu0 0.0
    %v507 = vand.u32 %v57, 4294901760
    %v508 = vsub.f32 %v57, %v507
    %509 = vmatpush1.msra.mxu0 %v508
    %510 = vmatprep.subr.mxu0 0.0
    %v511 = vand.u32 %v58, 4294901760
    %v512 = vsub.f32 %v58, %v511
    %513 = vmatpush1.msra.mxu0 %v512
    %514 = vmatprep.subr.mxu0 0.0
    %515 = vmatpush1.msra.mxu0 0.0
    %516 = vmatprep.subr.mxu0 0.0
    %517 = vmatpush1.msra.mxu0 0.0
    %518 = vmatprep.subr.mxu0 0.0
    %519 = vmatpush1.msra.mxu0 0.0
    %520 = vmatprep.subr.mxu0 0.0
    %521 = vmatpush1.msra.mxu0 0.0
    %522 = vmatprep.subr.mxu0 0.0
    %523 = vmatpush1.msra.mxu0 0.0
    %524 = vmatprep.subr.mxu0 0.0
    %525 = vmatpush1.msra.mxu0 0.0
    %526 = vmatprep.subr.mxu0 0.0
    %527 = vmatpush1.msra.mxu0 0.0
    %528 = vmatprep.subr.mxu0 0.0
    %529 = vmatpush1.msra.mxu0 0.0
    %530 = vmatprep.subr.mxu0 0.0
    %531 = vmatpush1.msra.mxu0 0.0
    %532 = vmatprep.subr.mxu0 0.0
    %533 = vmatpush1.msra.mxu0 0.0
    %534 = vmatprep.subr.mxu0 0.0
    %535 = vmatpush1.msra.mxu0 0.0
    %536 = vmatprep.subr.mxu0 0.0
    %537 = vmatpush1.msra.mxu0 0.0
    %538 = vmatprep.subr.mxu0 0.0
    %539 = vmatpush1.msra.mxu0 0.0
    %540 = vmatprep.subr.mxu0 0.0
    %541 = vmatpush1.msra.mxu0 0.0
    %542 = vmatprep.subr.mxu0 0.0
    %543 = vmatpush1.msra.mxu0 0.0
    %544 = vmatprep.subr.mxu0 0.0
    %545 = vmatpush1.msra.mxu0 0.0
    %546 = vmatprep.subr.mxu0 0.0
    %547 = vmatpush1.msra.mxu0 0.0
    %548 = vmatprep.subr.mxu0 0.0
    %549 = vmatpush1.msra.mxu0 0.0
    %550 = vmatprep.subr.mxu0 0.0
    %551 = vmatpush1.msra.mxu0 0.0
    %552 = vmatprep.subr.mxu0 0.0
    %553 = vmatpush1.msra.mxu0 0.0
    %554 = vmatprep.subr.mxu0 0.0
    %555 = vmatpush1.msra.mxu0 0.0
    %556 = vmatprep.subr.mxu0 0.0
    %557 = vmatpush1.msra.mxu0 0.0
    %558 = vmatprep.subr.mxu0 0.0
    %559 = vmatpush1.msra.mxu0 0.0
    %560 = vmatprep.subr.mxu0 0.0
    %561 = vmatpush1.msra.mxu0 0.0
    %562 = vmatprep.subr.mxu0 0.0
    %563 = vmatpush1.msra.mxu0 0.0
    %564 = vmatprep.subr.mxu0 0.0
    %565 = vmatpush1.msra.mxu0 0.0
    %566 = vmatprep.subr.mxu0 0.0
    %567 = vmatpush1.msra.mxu0 0.0
    %568 = vmatprep.subr.mxu0 0.0
    %569 = vmatpush1.msra.mxu0 0.0
    %570 = vmatprep.subr.mxu0 0.0
    %571 = vmatpush1.msra.mxu0 0.0
    %572 = vmatprep.subr.mxu0 0.0
    %573 = vmatpush1.msra.mxu0 0.0
    %574 = vmatprep.mubr.f32.mxu0 0.0
    %v575 = vand.u32 %v61, 4294901760
    %v576 = vsub.f32 %v61, %v575
    %577 = vmatmul.mubr.f32.gmra.mrb[0].mxu0 %v576
    %v578 = vpop.f32.mrb[0].mxu0
    %v579 = vadd.f32 %v413, %v578
    %v580 = vpop.f32.mrb[0].mxu0
    %581 = vmatprep.mubr.f32.mxu0 0.0
    %v582 = vand.u32 %v64, 4294901760
    %v583 = vsub.f32 %v64, %v582
    %584 = vmatmul.mubr.f32.gmra.mrb[0].mxu0 %v583
    %v585 = vpop.f32.mrb[0].mxu0
    %v586 = vadd.f32 %v419, %v585
    %v587 = vpop.f32.mrb[0].mxu0
    %588 = vmatprep.mubr.f32.mxu0 0.0
    %v589 = vand.u32 %v67, 4294901760
    %v590 = vsub.f32 %v67, %v589
    %591 = vmatmul.mubr.f32.gmra.mrb[0].mxu0 %v590
    %v592 = vpop.f32.mrb[0].mxu0
    %v593 = vadd.f32 %v425, %v592
    %v594 = vpop.f32.mrb[0].mxu0
    %595 = vmatprep.mubr.f32.mxu0 0.0
    %v596 = vand.u32 %v70, 4294901760
    %v597 = vsub.f32 %v70, %v596
    %598 = vmatmul.mubr.f32.gmra.mrb[0].mxu0 %v597
    %v599 = vpop.f32.mrb[0].mxu0
    %v600 = vadd.f32 %v431, %v599
    %v601 = vpop.f32.mrb[0].mxu0
    %602 = vmatprep.mubr.f32.mxu0 0.0
    %v603 = vand.u32 %v73, 4294901760
    %v604 = vsub.f32 %v73, %v603
    %605 = vmatmul.mubr.f32.gmra.mrb[0].mxu0 %v604
    %v606 = vpop.f32.mrb[0].mxu0
    %v607 = vadd.f32 %v437, %v606
    %v608 = vpop.f32.mrb[0].mxu0
    %609 = vmatprep.mubr.f32.mxu0 0.0
    %v610 = vand.u32 %v76, 4294901760
    %v611 = vsub.f32 %v76, %v610
    %612 = vmatmul.mubr.f32.gmra.mrb[0].mxu0 %v611
    %v613 = vpop.f32.mrb[0].mxu0
    %v614 = vadd.f32 %v443, %v613
    %v615 = vpop.f32.mrb[0].mxu0
    %616 = vmatprep.mubr.f32.mxu0 0.0
    %v617 = vand.u32 %v79, 4294901760
    %v618 = vsub.f32 %v79, %v617
    %619 = vmatmul.mubr.f32.gmra.mrb[0].mxu0 %v618
    %v620 = vpop.f32.mrb[0].mxu0
    %v621 = vadd.f32 %v449, %v620
    %v622 = vpop.f32.mrb[0].mxu0
    %623 = vmatprep.mubr.f32.mxu0 0.0
    %v624 = vand.u32 %v82, 4294901760
    %v625 = vsub.f32 %v82, %v624
    %626 = vmatmul.mubr.f32.gmra.mrb[0].mxu0 %v625
    %v627 = vpop.f32.mrb[0].mxu0
    %v628 = vadd.f32 %v455, %v627
    %v629 = vpop.f32.mrb[0].mxu0
    %630 = vmatprep.mubr.f32.mxu0 0.0
    %v631 = vand.u32 %v85, 4294901760
    %v632 = vsub.f32 %v85, %v631
    %633 = vmatmul.mubr.f32.gmra.mrb[0].mxu0 %v632
    %v634 = vpop.f32.mrb[0].mxu0
    %v635 = vadd.f32 %v461, %v634
    %v636 = vpop.f32.mrb[0].mxu0
    %637 = vmatprep.mubr.f32.mxu0 0.0
    %v638 = vand.u32 %v88, 4294901760
    %v639 = vsub.f32 %v88, %v638
    %640 = vmatmul.mubr.f32.gmra.mrb[0].mxu0 %v639
    %v641 = vpop.f32.mrb[0].mxu0
    %v642 = vadd.f32 %v467, %v641
    %v643 = vpop.f32.mrb[0].mxu0
    %644 = vmatprep.mubr.f32.mxu0 0.0
    %v645 = vand.u32 %v91, 4294901760
    %v646 = vsub.f32 %v91, %v645
    %647 = vmatmul.mubr.f32.gmra.mrb[0].mxu0 %v646
    %v648 = vpop.f32.mrb[0].mxu0
    %v649 = vadd.f32 %v473, %v648
    %v650 = vpop.f32.mrb[0].mxu0
    %651 = vmatprep.mubr.f32.mxu0 0.0
    %v652 = vand.u32 %v94, 4294901760
    %v653 = vsub.f32 %v94, %v652
    %654 = vmatmul.mubr.f32.gmra.mrb[0].mxu0 %v653
    %v655 = vpop.f32.mrb[0].mxu0
    %v656 = vadd.f32 %v479, %v655
    %v657 = vpop.f32.mrb[0].mxu0
    %658 = vmatprep.mubr.f32.mxu0 0.0
    %v659 = vand.u32 %v97, 4294901760
    %v660 = vsub.f32 %v97, %v659
    %661 = vmatmul.mubr.f32.gmra.mrb[0].mxu0 %v660
    %v662 = vpop.f32.mrb[0].mxu0
    %v663 = vadd.f32 %v485, %v662
    %v664 = vpop.f32.mrb[0].mxu0
    %665 = vmatprep.mubr.f32.mxu0 0.0
    %v666 = vand.u32 %v100, 4294901760
    %v667 = vsub.f32 %v100, %v666
    %668 = vmatmul.mubr.f32.gmra.mrb[0].mxu0 %v667
    %v669 = vpop.f32.mrb[0].mxu0
    %v670 = vadd.f32 %v491, %v669
    %v671 = vpop.f32.mrb[0].mxu0
    %672 = vmatprep.mubr.f32.mxu0 0.0
    %v673 = vand.u32 %v103, 4294901760
    %v674 = vsub.f32 %v103, %v673
    %675 = vmatmul.mubr.f32.gmra.mrb[0].mxu0 %v674
    %v676 = vpop.f32.mrb[0].mxu0
    %v677 = vadd.f32 %v497, %v676
    %v678 = vpop.f32.mrb[0].mxu0
    %679 = vmatprep.mubr.f32.mxu0 0.0
    %v680 = vand.u32 %v106, 4294901760
    %v681 = vsub.f32 %v106, %v680
    %682 = vmatmul.mubr.f32.gmra.mrb[0].mxu0 %v681
    %v683 = vpop.f32.mrb[0].mxu0
    %v684 = vadd.f32 %v503, %v683
    %v685 = vpop.f32.mrb[0].mxu0
    %686 = vdwg.mxu0
    %687 = vmatprep.subr.mxu0 0.0
    %v688 = vand.u32 %v57, 4294901760
    %689 = vmatpush1.msra.mxu0 %v688
    %690 = vmatprep.subr.mxu0 0.0
    %v691 = vand.u32 %v58, 4294901760
    %692 = vmatpush1.msra.mxu0 %v691
    %693 = vmatprep.subr.mxu0 0.0
    %694 = vmatpush1.msra.mxu0 0.0
    %695 = vmatprep.subr.mxu0 0.0
    %696 = vmatpush1.msra.mxu0 0.0
    %697 = vmatprep.subr.mxu0 0.0
    %698 = vmatpush1.msra.mxu0 0.0
    %699 = vmatprep.subr.mxu0 0.0
    %700 = vmatpush1.msra.mxu0 0.0
    %701 = vmatprep.subr.mxu0 0.0
    %702 = vmatpush1.msra.mxu0 0.0
    %703 = vmatprep.subr.mxu0 0.0
    %704 = vmatpush1.msra.mxu0 0.0
    %705 = vmatprep.subr.mxu0 0.0
    %706 = vmatpush1.msra.mxu0 0.0
    %707 = vmatprep.subr.mxu0 0.0
    %708 = vmatpush1.msra.mxu0 0.0
    %709 = vmatprep.subr.mxu0 0.0
    %710 = vmatpush1.msra.mxu0 0.0
    %711 = vmatprep.subr.mxu0 0.0
    %712 = vmatpush1.msra.mxu0 0.0
    %713 = vmatprep.subr.mxu0 0.0
    %714 = vmatpush1.msra.mxu0 0.0
    %715 = vmatprep.subr.mxu0 0.0
    %716 = vmatpush1.msra.mxu0 0.0
    %717 = vmatprep.subr.mxu0 0.0
    %718 = vmatpush1.msra.mxu0 0.0
    %719 = vmatprep.subr.mxu0 0.0
    %720 = vmatpush1.msra.mxu0 0.0
    %721 = vmatprep.subr.mxu0 0.0
    %722 = vmatpush1.msra.mxu0 0.0
    %723 = vmatprep.subr.mxu0 0.0
    %724 = vmatpush1.msra.mxu0 0.0
    %725 = vmatprep.subr.mxu0 0.0
    %726 = vmatpush1.msra.mxu0 0.0
    %727 = vmatprep.subr.mxu0 0.0
    %728 = vmatpush1.msra.mxu0 0.0
    %729 = vmatprep.subr.mxu0 0.0
    %730 = vmatpush1.msra.mxu0 0.0
    %731 = vmatprep.subr.mxu0 0.0
    %732 = vmatpush1.msra.mxu0 0.0
    %733 = vmatprep.subr.mxu0 0.0
    %734 = vmatpush1.msra.mxu0 0.0
    %735 = vmatprep.subr.mxu0 0.0
    %736 = vmatpush1.msra.mxu0 0.0
    %737 = vmatprep.subr.mxu0 0.0
    %738 = vmatpush1.msra.mxu0 0.0
    %739 = vmatprep.subr.mxu0 0.0
    %740 = vmatpush1.msra.mxu0 0.0
    %741 = vmatprep.subr.mxu0 0.0
    %742 = vmatpush1.msra.mxu0 0.0
    %743 = vmatprep.subr.mxu0 0.0
    %744 = vmatpush1.msra.mxu0 0.0
    %745 = vmatprep.subr.mxu0 0.0
    %746 = vmatpush1.msra.mxu0 0.0
    %747 = vmatprep.subr.mxu0 0.0
    %748 = vmatpush1.msra.mxu0 0.0
    %749 = vmatprep.subr.mxu0 0.0
    %750 = vmatpush1.msra.mxu0 0.0
    %751 = vmatprep.subr.mxu0 0.0
    %752 = vmatpush1.msra.mxu0 0.0
    %753 = vmatprep.mubr.f32.mxu0 0.0
    %v754 = vand.u32 %v61, 4294901760
    %v755 = vsub.f32 %v61, %v754
    %v756 = vand.u32 %v755, 4294901760
    %757 = vmatmul.mubr.f32.gmra.mrb[0].mxu0 %v756
    %v758 = vpop.f32.mrb[0].mxu0
    %v759 = vadd.f32 %v579, %v758
    %v760 = vpop.f32.mrb[0].mxu0
    %761 = vmatprep.mubr.f32.mxu0 0.0
    %v762 = vand.u32 %v64, 4294901760
    %v763 = vsub.f32 %v64, %v762
    %v764 = vand.u32 %v763, 4294901760
    %765 = vmatmul.mubr.f32.gmra.mrb[0].mxu0 %v764
    %v766 = vpop.f32.mrb[0].mxu0
    %v767 = vadd.f32 %v586, %v766
    %v768 = vpop.f32.mrb[0].mxu0
    %769 = vmatprep.mubr.f32.mxu0 0.0
    %v770 = vand.u32 %v67, 4294901760
    %v771 = vsub.f32 %v67, %v770
    %v772 = vand.u32 %v771, 4294901760
    %773 = vmatmul.mubr.f32.gmra.mrb[0].mxu0 %v772
    %v774 = vpop.f32.mrb[0].mxu0
    %v775 = vadd.f32 %v593, %v774
    %v776 = vpop.f32.mrb[0].mxu0
    %777 = vmatprep.mubr.f32.mxu0 0.0
    %v778 = vand.u32 %v70, 4294901760
    %v779 = vsub.f32 %v70, %v778
    %v780 = vand.u32 %v779, 4294901760
    %781 = vmatmul.mubr.f32.gmra.mrb[0].mxu0 %v780
    %v782 = vpop.f32.mrb[0].mxu0
    %v783 = vadd.f32 %v600, %v782
    %v784 = vpop.f32.mrb[0].mxu0
    %785 = vmatprep.mubr.f32.mxu0 0.0
    %v786 = vand.u32 %v73, 4294901760
    %v787 = vsub.f32 %v73, %v786
    %v788 = vand.u32 %v787, 4294901760
    %789 = vmatmul.mubr.f32.gmra.mrb[0].mxu0 %v788
    %v790 = vpop.f32.mrb[0].mxu0
    %v791 = vadd.f32 %v607, %v790
    %v792 = vpop.f32.mrb[0].mxu0
    %793 = vmatprep.mubr.f32.mxu0 0.0
    %v794 = vand.u32 %v76, 4294901760
    %v795 = vsub.f32 %v76, %v794
    %v796 = vand.u32 %v795, 4294901760
    %797 = vmatmul.mubr.f32.gmra.mrb[0].mxu0 %v796
    %v798 = vpop.f32.mrb[0].mxu0
    %v799 = vadd.f32 %v614, %v798
    %v800 = vpop.f32.mrb[0].mxu0
    %801 = vmatprep.mubr.f32.mxu0 0.0
    %v802 = vand.u32 %v79, 4294901760
    %v803 = vsub.f32 %v79, %v802
    %v804 = vand.u32 %v803, 4294901760
    %805 = vmatmul.mubr.f32.gmra.mrb[0].mxu0 %v804
    %v806 = vpop.f32.mrb[0].mxu0
    %v807 = vadd.f32 %v621, %v806
    %v808 = vpop.f32.mrb[0].mxu0
    %809 = vmatprep.mubr.f32.mxu0 0.0
    %v810 = vand.u32 %v82, 4294901760
    %v811 = vsub.f32 %v82, %v810
    %v812 = vand.u32 %v811, 4294901760
    %813 = vmatmul.mubr.f32.gmra.mrb[0].mxu0 %v812
    %v814 = vpop.f32.mrb[0].mxu0
    %v815 = vadd.f32 %v628, %v814
    %v816 = vpop.f32.mrb[0].mxu0
    %817 = vmatprep.mubr.f32.mxu0 0.0
    %v818 = vand.u32 %v85, 4294901760
    %v819 = vsub.f32 %v85, %v818
    %v820 = vand.u32 %v819, 4294901760
    %821 = vmatmul.mubr.f32.gmra.mrb[0].mxu0 %v820
    %v822 = vpop.f32.mrb[0].mxu0
    %v823 = vadd.f32 %v635, %v822
    %v824 = vpop.f32.mrb[0].mxu0
    %825 = vmatprep.mubr.f32.mxu0 0.0
    %v826 = vand.u32 %v88, 4294901760
    %v827 = vsub.f32 %v88, %v826
    %v828 = vand.u32 %v827, 4294901760
    %829 = vmatmul.mubr.f32.gmra.mrb[0].mxu0 %v828
    %v830 = vpop.f32.mrb[0].mxu0
    %v831 = vadd.f32 %v642, %v830
    %v832 = vpop.f32.mrb[0].mxu0
    %833 = vmatprep.mubr.f32.mxu0 0.0
    %v834 = vand.u32 %v91, 4294901760
    %v835 = vsub.f32 %v91, %v834
    %v836 = vand.u32 %v835, 4294901760
    %837 = vmatmul.mubr.f32.gmra.mrb[0].mxu0 %v836
    %v838 = vpop.f32.mrb[0].mxu0
    %v839 = vadd.f32 %v649, %v838
    %v840 = vpop.f32.mrb[0].mxu0
    %841 = vmatprep.mubr.f32.mxu0 0.0
    %v842 = vand.u32 %v94, 4294901760
    %v843 = vsub.f32 %v94, %v842
    %v844 = vand.u32 %v843, 4294901760
    %845 = vmatmul.mubr.f32.gmra.mrb[0].mxu0 %v844
    %v846 = vpop.f32.mrb[0].mxu0
    %v847 = vadd.f32 %v656, %v846
    %v848 = vpop.f32.mrb[0].mxu0
    %849 = vmatprep.mubr.f32.mxu0 0.0
    %v850 = vand.u32 %v97, 4294901760
    %v851 = vsub.f32 %v97, %v850
    %v852 = vand.u32 %v851, 4294901760
    %853 = vmatmul.mubr.f32.gmra.mrb[0].mxu0 %v852
    %v854 = vpop.f32.mrb[0].mxu0
    %v855 = vadd.f32 %v663, %v854
    %v856 = vpop.f32.mrb[0].mxu0
    %857 = vmatprep.mubr.f32.mxu0 0.0
    %v858 = vand.u32 %v100, 4294901760
    %v859 = vsub.f32 %v100, %v858
    %v860 = vand.u32 %v859, 4294901760
    %861 = vmatmul.mubr.f32.gmra.mrb[0].mxu0 %v860
    %v862 = vpop.f32.mrb[0].mxu0
    %v863 = vadd.f32 %v670, %v862
    %v864 = vpop.f32.mrb[0].mxu0
    %865 = vmatprep.mubr.f32.mxu0 0.0
    %v866 = vand.u32 %v103, 4294901760
    %v867 = vsub.f32 %v103, %v866
    %v868 = vand.u32 %v867, 4294901760
    %869 = vmatmul.mubr.f32.gmra.mrb[0].mxu0 %v868
    %v870 = vpop.f32.mrb[0].mxu0
    %v871 = vadd.f32 %v677, %v870
    %v872 = vpop.f32.mrb[0].mxu0
    %873 = vmatprep.mubr.f32.mxu0 0.0
    %v874 = vand.u32 %v106, 4294901760
    %v875 = vsub.f32 %v106, %v874
    %v876 = vand.u32 %v875, 4294901760
    %877 = vmatmul.mubr.f32.gmra.mrb[0].mxu0 %v876
    %v878 = vpop.f32.mrb[0].mxu0
    %v879 = vadd.f32 %v684, %v878
    %v880 = vpop.f32.mrb[0].mxu0
    %881 = vdwg.mxu0
    %882 = vmatprep.subr.mxu0 0.0
    %v883 = vand.u32 %v57, 4294901760
    %v884 = vsub.f32 %v57, %v883
    %v885 = vand.u32 %v884, 4294901760
    %886 = vmatpush1.msra.mxu0 %v885
    %887 = vmatprep.subr.mxu0 0.0
    %v888 = vand.u32 %v58, 4294901760
    %v889 = vsub.f32 %v58, %v888
    %v890 = vand.u32 %v889, 4294901760
    %891 = vmatpush1.msra.mxu0 %v890
    %892 = vmatprep.subr.mxu0 0.0
    %893 = vmatpush1.msra.mxu0 0.0
    %894 = vmatprep.subr.mxu0 0.0
    %895 = vmatpush1.msra.mxu0 0.0
    %896 = vmatprep.subr.mxu0 0.0
    %897 = vmatpush1.msra.mxu0 0.0
    %898 = vmatprep.subr.mxu0 0.0
    %899 = vmatpush1.msra.mxu0 0.0
    %900 = vmatprep.subr.mxu0 0.0
    %901 = vmatpush1.msra.mxu0 0.0
    %902 = vmatprep.subr.mxu0 0.0
    %903 = vmatpush1.msra.mxu0 0.0
    %904 = vmatprep.subr.mxu0 0.0
    %905 = vmatpush1.msra.mxu0 0.0
    %906 = vmatprep.subr.mxu0 0.0
    %907 = vmatpush1.msra.mxu0 0.0
    %908 = vmatprep.subr.mxu0 0.0
    %909 = vmatpush1.msra.mxu0 0.0
    %910 = vmatprep.subr.mxu0 0.0
    %911 = vmatpush1.msra.mxu0 0.0
    %912 = vmatprep.subr.mxu0 0.0
    %913 = vmatpush1.msra.mxu0 0.0
    %914 = vmatprep.subr.mxu0 0.0
    %915 = vmatpush1.msra.mxu0 0.0
    %916 = vmatprep.subr.mxu0 0.0
    %917 = vmatpush1.msra.mxu0 0.0
    %918 = vmatprep.subr.mxu0 0.0
    %919 = vmatpush1.msra.mxu0 0.0
    %920 = vmatprep.subr.mxu0 0.0
    %921 = vmatpush1.msra.mxu0 0.0
    %922 = vmatprep.subr.mxu0 0.0
    %923 = vmatpush1.msra.mxu0 0.0
    %924 = vmatprep.subr.mxu0 0.0
    %925 = vmatpush1.msra.mxu0 0.0
    %926 = vmatprep.subr.mxu0 0.0
    %927 = vmatpush1.msra.mxu0 0.0
    %928 = vmatprep.subr.mxu0 0.0
    %929 = vmatpush1.msra.mxu0 0.0
    %930 = vmatprep.subr.mxu0 0.0
    %931 = vmatpush1.msra.mxu0 0.0
    %932 = vmatprep.subr.mxu0 0.0
    %933 = vmatpush1.msra.mxu0 0.0
    %934 = vmatprep.subr.mxu0 0.0
    %935 = vmatpush1.msra.mxu0 0.0
    %936 = vmatprep.subr.mxu0 0.0
    %937 = vmatpush1.msra.mxu0 0.0
    %938 = vmatprep.subr.mxu0 0.0
    %939 = vmatpush1.msra.mxu0 0.0
    %940 = vmatprep.subr.mxu0 0.0
    %941 = vmatpush1.msra.mxu0 0.0
    %942 = vmatprep.subr.mxu0 0.0
    %943 = vmatpush1.msra.mxu0 0.0
    %944 = vmatprep.subr.mxu0 0.0
    %945 = vmatpush1.msra.mxu0 0.0
    %946 = vmatprep.subr.mxu0 0.0
    %947 = vmatpush1.msra.mxu0 0.0
    %948 = vmatprep.subr.mxu0 0.0
    %949 = vmatpush1.msra.mxu0 0.0
    %950 = vmatprep.subr.mxu0 0.0
    %951 = vmatpush1.msra.mxu0 0.0
    %952 = vmatprep.mubr.f32.mxu0 0.0
    %v953 = vand.u32 %v61, 4294901760
    %954 = vmatmul.mubr.f32.gmra.mrb[0].mxu0 %v953
    %v955 = vpop.f32.mrb[0].mxu0
    %v956 = vadd.f32 %v759, %v955
    %v957 = vpop.f32.mrb[0].mxu0
    %958 = vmatprep.mubr.f32.mxu0 0.0
    %v959 = vand.u32 %v64, 4294901760
    %960 = vmatmul.mubr.f32.gmra.mrb[0].mxu0 %v959
    %v961 = vpop.f32.mrb[0].mxu0
    %v962 = vadd.f32 %v767, %v961
    %v963 = vpop.f32.mrb[0].mxu0
    %964 = vmatprep.mubr.f32.mxu0 0.0
    %v965 = vand.u32 %v67, 4294901760
    %966 = vmatmul.mubr.f32.gmra.mrb[0].mxu0 %v965
    %v967 = vpop.f32.mrb[0].mxu0
    %v968 = vadd.f32 %v775, %v967
    %v969 = vpop.f32.mrb[0].mxu0
    %970 = vmatprep.mubr.f32.mxu0 0.0
    %v971 = vand.u32 %v70, 4294901760
    %972 = vmatmul.mubr.f32.gmra.mrb[0].mxu0 %v971
    %v973 = vpop.f32.mrb[0].mxu0
    %v974 = vadd.f32 %v783, %v973
    %v975 = vpop.f32.mrb[0].mxu0
    %976 = vmatprep.mubr.f32.mxu0 0.0
    %v977 = vand.u32 %v73, 4294901760
    %978 = vmatmul.mubr.f32.gmra.mrb[0].mxu0 %v977
    %v979 = vpop.f32.mrb[0].mxu0
    %v980 = vadd.f32 %v791, %v979
    %v981 = vpop.f32.mrb[0].mxu0
    %982 = vmatprep.mubr.f32.mxu0 0.0
    %v983 = vand.u32 %v76, 4294901760
    %984 = vmatmul.mubr.f32.gmra.mrb[0].mxu0 %v983
    %v985 = vpop.f32.mrb[0].mxu0
    %v986 = vadd.f32 %v799, %v985
    %v987 = vpop.f32.mrb[0].mxu0
    %988 = vmatprep.mubr.f32.mxu0 0.0
    %v989 = vand.u32 %v79, 4294901760
    %990 = vmatmul.mubr.f32.gmra.mrb[0].mxu0 %v989
    %v991 = vpop.f32.mrb[0].mxu0
    %v992 = vadd.f32 %v807, %v991
    %v993 = vpop.f32.mrb[0].mxu0
    %994 = vmatprep.mubr.f32.mxu0 0.0
    %v995 = vand.u32 %v82, 4294901760
    %996 = vmatmul.mubr.f32.gmra.mrb[0].mxu0 %v995
    %v997 = vpop.f32.mrb[0].mxu0
    %v998 = vadd.f32 %v815, %v997
    %v999 = vpop.f32.mrb[0].mxu0
    %1000 = vmatprep.mubr.f32.mxu0 0.0
    %v1001 = vand.u32 %v85, 4294901760
    %1002 = vmatmul.mubr.f32.gmra.mrb[0].mxu0 %v1001
    %v1003 = vpop.f32.mrb[0].mxu0
    %v1004 = vadd.f32 %v823, %v1003
    %v1005 = vpop.f32.mrb[0].mxu0
    %1006 = vmatprep.mubr.f32.mxu0 0.0
    %v1007 = vand.u32 %v88, 4294901760
    %1008 = vmatmul.mubr.f32.gmra.mrb[0].mxu0 %v1007
    %v1009 = vpop.f32.mrb[0].mxu0
    %v1010 = vadd.f32 %v831, %v1009
    %v1011 = vpop.f32.mrb[0].mxu0
    %1012 = vmatprep.mubr.f32.mxu0 0.0
    %v1013 = vand.u32 %v91, 4294901760
    %1014 = vmatmul.mubr.f32.gmra.mrb[0].mxu0 %v1013
    %v1015 = vpop.f32.mrb[0].mxu0
    %v1016 = vadd.f32 %v839, %v1015
    %v1017 = vpop.f32.mrb[0].mxu0
    %1018 = vmatprep.mubr.f32.mxu0 0.0
    %v1019 = vand.u32 %v94, 4294901760
    %1020 = vmatmul.mubr.f32.gmra.mrb[0].mxu0 %v1019
    %v1021 = vpop.f32.mrb[0].mxu0
    %v1022 = vadd.f32 %v847, %v1021
    %v1023 = vpop.f32.mrb[0].mxu0
    %1024 = vmatprep.mubr.f32.mxu0 0.0
    %v1025 = vand.u32 %v97, 4294901760
    %1026 = vmatmul.mubr.f32.gmra.mrb[0].mxu0 %v1025
    %v1027 = vpop.f32.mrb[0].mxu0
    %v1028 = vadd.f32 %v855, %v1027
    %v1029 = vpop.f32.mrb[0].mxu0
    %1030 = vmatprep.mubr.f32.mxu0 0.0
    %v1031 = vand.u32 %v100, 4294901760
    %1032 = vmatmul.mubr.f32.gmra.mrb[0].mxu0 %v1031
    %v1033 = vpop.f32.mrb[0].mxu0
    %v1034 = vadd.f32 %v863, %v1033
    %v1035 = vpop.f32.mrb[0].mxu0
    %1036 = vmatprep.mubr.f32.mxu0 0.0
    %v1037 = vand.u32 %v103, 4294901760
    %1038 = vmatmul.mubr.f32.gmra.mrb[0].mxu0 %v1037
    %v1039 = vpop.f32.mrb[0].mxu0
    %v1040 = vadd.f32 %v871, %v1039
    %v1041 = vpop.f32.mrb[0].mxu0
    %1042 = vmatprep.mubr.f32.mxu0 0.0
    %v1043 = vand.u32 %v106, 4294901760
    %1044 = vmatmul.mubr.f32.gmra.mrb[0].mxu0 %v1043
    %v1045 = vpop.f32.mrb[0].mxu0
    %v1046 = vadd.f32 %v879, %v1045
    %v1047 = vpop.f32.mrb[0].mxu0
    %1048 = vdwg.mxu0
    %1049 = vmatprep.subr.mxu0 0.0
    %v1050 = vand.u32 %v57, 4294901760
    %1051 = vmatpush1.msra.mxu0 %v1050
    %1052 = vmatprep.subr.mxu0 0.0
    %v1053 = vand.u32 %v58, 4294901760
    %1054 = vmatpush1.msra.mxu0 %v1053
    %1055 = vmatprep.subr.mxu0 0.0
    %1056 = vmatpush1.msra.mxu0 0.0
    %1057 = vmatprep.subr.mxu0 0.0
    %1058 = vmatpush1.msra.mxu0 0.0
    %1059 = vmatprep.subr.mxu0 0.0
    %1060 = vmatpush1.msra.mxu0 0.0
    %1061 = vmatprep.subr.mxu0 0.0
    %1062 = vmatpush1.msra.mxu0 0.0
    %1063 = vmatprep.subr.mxu0 0.0
    %1064 = vmatpush1.msra.mxu0 0.0
    %1065 = vmatprep.subr.mxu0 0.0
    %1066 = vmatpush1.msra.mxu0 0.0
    %1067 = vmatprep.subr.mxu0 0.0
    %1068 = vmatpush1.msra.mxu0 0.0
    %1069 = vmatprep.subr.mxu0 0.0
    %1070 = vmatpush1.msra.mxu0 0.0
    %1071 = vmatprep.subr.mxu0 0.0
    %1072 = vmatpush1.msra.mxu0 0.0
    %1073 = vmatprep.subr.mxu0 0.0
    %1074 = vmatpush1.msra.mxu0 0.0
    %1075 = vmatprep.subr.mxu0 0.0
    %1076 = vmatpush1.msra.mxu0 0.0
    %1077 = vmatprep.subr.mxu0 0.0
    %1078 = vmatpush1.msra.mxu0 0.0
    %1079 = vmatprep.subr.mxu0 0.0
    %1080 = vmatpush1.msra.mxu0 0.0
    %1081 = vmatprep.subr.mxu0 0.0
    %1082 = vmatpush1.msra.mxu0 0.0
    %1083 = vmatprep.subr.mxu0 0.0
    %1084 = vmatpush1.msra.mxu0 0.0
    %1085 = vmatprep.subr.mxu0 0.0
    %1086 = vmatpush1.msra.mxu0 0.0
    %1087 = vmatprep.subr.mxu0 0.0
    %1088 = vmatpush1.msra.mxu0 0.0
    %1089 = vmatprep.subr.mxu0 0.0
    %1090 = vmatpush1.msra.mxu0 0.0
    %1091 = vmatprep.subr.mxu0 0.0
    %1092 = vmatpush1.msra.mxu0 0.0
    %1093 = vmatprep.subr.mxu0 0.0
    %1094 = vmatpush1.msra.mxu0 0.0
    %1095 = vmatprep.subr.mxu0 0.0
    %1096 = vmatpush1.msra.mxu0 0.0
    %1097 = vmatprep.subr.mxu0 0.0
    %1098 = vmatpush1.msra.mxu0 0.0
    %1099 = vmatprep.subr.mxu0 0.0
    %1100 = vmatpush1.msra.mxu0 0.0
    %1101 = vmatprep.subr.mxu0 0.0
    %1102 = vmatpush1.msra.mxu0 0.0
    %1103 = vmatprep.subr.mxu0 0.0
    %1104 = vmatpush1.msra.mxu0 0.0
    %1105 = vmatprep.subr.mxu0 0.0
    %1106 = vmatpush1.msra.mxu0 0.0
    %1107 = vmatprep.subr.mxu0 0.0
    %1108 = vmatpush1.msra.mxu0 0.0
    %1109 = vmatprep.subr.mxu0 0.0
    %1110 = vmatpush1.msra.mxu0 0.0
    %1111 = vmatprep.subr.mxu0 0.0
    %1112 = vmatpush1.msra.mxu0 0.0
    %1113 = vmatprep.subr.mxu0 0.0
    %1114 = vmatpush1.msra.mxu0 0.0
    %1115 = vmatprep.mubr.f32.mxu0 0.0
    %v1116 = vand.u32 %v61, 4294901760
    %1117 = vmatmul.mubr.f32.gmra.mrb[0].mxu0 %v1116
    %v1118 = vpop.f32.mrb[0].mxu0
    %v1119 = vadd.f32 %v956, %v1118
    %v1120 = vpop.f32.mrb[0].mxu0
    %1121 = vmatprep.mubr.f32.mxu0 0.0
    %v1122 = vand.u32 %v64, 4294901760
    %1123 = vmatmul.mubr.f32.gmra.mrb[0].mxu0 %v1122
    %v1124 = vpop.f32.mrb[0].mxu0
    %v1125 = vadd.f32 %v962, %v1124
    %v1126 = vpop.f32.mrb[0].mxu0
    %1127 = vmatprep.mubr.f32.mxu0 0.0
    %v1128 = vand.u32 %v67, 4294901760
    %1129 = vmatmul.mubr.f32.gmra.mrb[0].mxu0 %v1128
    %v1130 = vpop.f32.mrb[0].mxu0
    %v1131 = vadd.f32 %v968, %v1130
    %v1132 = vpop.f32.mrb[0].mxu0
    %1133 = vmatprep.mubr.f32.mxu0 0.0
    %v1134 = vand.u32 %v70, 4294901760
    %1135 = vmatmul.mubr.f32.gmra.mrb[0].mxu0 %v1134
    %v1136 = vpop.f32.mrb[0].mxu0
    %v1137 = vadd.f32 %v974, %v1136
    %v1138 = vpop.f32.mrb[0].mxu0
    %1139 = vmatprep.mubr.f32.mxu0 0.0
    %v1140 = vand.u32 %v73, 4294901760
    %1141 = vmatmul.mubr.f32.gmra.mrb[0].mxu0 %v1140
    %v1142 = vpop.f32.mrb[0].mxu0
    %v1143 = vadd.f32 %v980, %v1142
    %v1144 = vpop.f32.mrb[0].mxu0
    %1145 = vmatprep.mubr.f32.mxu0 0.0
    %v1146 = vand.u32 %v76, 4294901760
    %1147 = vmatmul.mubr.f32.gmra.mrb[0].mxu0 %v1146
    %v1148 = vpop.f32.mrb[0].mxu0
    %v1149 = vadd.f32 %v986, %v1148
    %v1150 = vpop.f32.mrb[0].mxu0
    %1151 = vmatprep.mubr.f32.mxu0 0.0
    %v1152 = vand.u32 %v79, 4294901760
    %1153 = vmatmul.mubr.f32.gmra.mrb[0].mxu0 %v1152
    %v1154 = vpop.f32.mrb[0].mxu0
    %v1155 = vadd.f32 %v992, %v1154
    %v1156 = vpop.f32.mrb[0].mxu0
    %1157 = vmatprep.mubr.f32.mxu0 0.0
    %v1158 = vand.u32 %v82, 4294901760
    %1159 = vmatmul.mubr.f32.gmra.mrb[0].mxu0 %v1158
    %v1160 = vpop.f32.mrb[0].mxu0
    %v1161 = vadd.f32 %v998, %v1160
    %v1162 = vpop.f32.mrb[0].mxu0
    %1163 = vmatprep.mubr.f32.mxu0 0.0
    %v1164 = vand.u32 %v85, 4294901760
    %1165 = vmatmul.mubr.f32.gmra.mrb[0].mxu0 %v1164
    %v1166 = vpop.f32.mrb[0].mxu0
    %v1167 = vadd.f32 %v1004, %v1166
    %v1168 = vpop.f32.mrb[0].mxu0
    %1169 = vmatprep.mubr.f32.mxu0 0.0
    %v1170 = vand.u32 %v88, 4294901760
    %1171 = vmatmul.mubr.f32.gmra.mrb[0].mxu0 %v1170
    %v1172 = vpop.f32.mrb[0].mxu0
    %v1173 = vadd.f32 %v1010, %v1172
    %v1174 = vpop.f32.mrb[0].mxu0
    %1175 = vmatprep.mubr.f32.mxu0 0.0
    %v1176 = vand.u32 %v91, 4294901760
    %1177 = vmatmul.mubr.f32.gmra.mrb[0].mxu0 %v1176
    %v1178 = vpop.f32.mrb[0].mxu0
    %v1179 = vadd.f32 %v1016, %v1178
    %v1180 = vpop.f32.mrb[0].mxu0
    %1181 = vmatprep.mubr.f32.mxu0 0.0
    %v1182 = vand.u32 %v94, 4294901760
    %1183 = vmatmul.mubr.f32.gmra.mrb[0].mxu0 %v1182
    %v1184 = vpop.f32.mrb[0].mxu0
    %v1185 = vadd.f32 %v1022, %v1184
    %v1186 = vpop.f32.mrb[0].mxu0
    %1187 = vmatprep.mubr.f32.mxu0 0.0
    %v1188 = vand.u32 %v97, 4294901760
    %1189 = vmatmul.mubr.f32.gmra.mrb[0].mxu0 %v1188
    %v1190 = vpop.f32.mrb[0].mxu0
    %v1191 = vadd.f32 %v1028, %v1190
    %v1192 = vpop.f32.mrb[0].mxu0
    %1193 = vmatprep.mubr.f32.mxu0 0.0
    %v1194 = vand.u32 %v100, 4294901760
    %1195 = vmatmul.mubr.f32.gmra.mrb[0].mxu0 %v1194
    %v1196 = vpop.f32.mrb[0].mxu0
    %v1197 = vadd.f32 %v1034, %v1196
    %v1198 = vpop.f32.mrb[0].mxu0
    %1199 = vmatprep.mubr.f32.mxu0 0.0
    %v1200 = vand.u32 %v103, 4294901760
    %1201 = vmatmul.mubr.f32.gmra.mrb[0].mxu0 %v1200
    %v1202 = vpop.f32.mrb[0].mxu0
    %v1203 = vadd.f32 %v1040, %v1202
    %v1204 = vpop.f32.mrb[0].mxu0
    %1205 = vmatprep.mubr.f32.mxu0 0.0
    %v1206 = vand.u32 %v106, 4294901760
    %1207 = vmatmul.mubr.f32.gmra.mrb[0].mxu0 %v1206
    %v1208 = vpop.f32.mrb[0].mxu0
    %v1209 = vadd.f32 %v1046, %v1208
    %v1210 = vpop.f32.mrb[0].mxu0
    %1211 = vdwg.mxu0
    %v1212 = vld [vmem:[%s3] sm:$0xf]
    %v1213 = vld [vmem:[%s1] sm:$0xff]
    %v1214 = vld [vmem:[%s1 + $0x8] sm:$0xff]
    %v1216 = vsel %vm59, %v1212, 0
    %1218 = vmatprep.subr.mxu0 0.0
    %v1219 = vand.u32 %v1213, 4294901760
    %1220 = vmatpush1.msra.mxu0 %v1219
    %1221 = vmatprep.subr.mxu0 0.0
    %v1222 = vand.u32 %v1214, 4294901760
    %1223 = vmatpush1.msra.mxu0 %v1222
    %1224 = vmatprep.subr.mxu0 0.0
    %1225 = vmatpush1.msra.mxu0 0.0
    %1226 = vmatprep.subr.mxu0 0.0
    %1227 = vmatpush1.msra.mxu0 0.0
    %1228 = vmatprep.subr.mxu0 0.0
    %1229 = vmatpush1.msra.mxu0 0.0
    %1230 = vmatprep.subr.mxu0 0.0
    %1231 = vmatpush1.msra.mxu0 0.0
    %1232 = vmatprep.subr.mxu0 0.0
    %1233 = vmatpush1.msra.mxu0 0.0
    %1234 = vmatprep.subr.mxu0 0.0
    %1235 = vmatpush1.msra.mxu0 0.0
    %1236 = vmatprep.subr.mxu0 0.0
    %1237 = vmatpush1.msra.mxu0 0.0
    %1238 = vmatprep.subr.mxu0 0.0
    %1239 = vmatpush1.msra.mxu0 0.0
    %1240 = vmatprep.subr.mxu0 0.0
    %1241 = vmatpush1.msra.mxu0 0.0
    %1242 = vmatprep.subr.mxu0 0.0
    %1243 = vmatpush1.msra.mxu0 0.0
    %1244 = vmatprep.subr.mxu0 0.0
    %1245 = vmatpush1.msra.mxu0 0.0
    %1246 = vmatprep.subr.mxu0 0.0
    %1247 = vmatpush1.msra.mxu0 0.0
    %1248 = vmatprep.subr.mxu0 0.0
    %1249 = vmatpush1.msra.mxu0 0.0
    %1250 = vmatprep.subr.mxu0 0.0
    %1251 = vmatpush1.msra.mxu0 0.0
    %1252 = vmatprep.subr.mxu0 0.0
    %1253 = vmatpush1.msra.mxu0 0.0
    %1254 = vmatprep.subr.mxu0 0.0
    %1255 = vmatpush1.msra.mxu0 0.0
    %1256 = vmatprep.subr.mxu0 0.0
    %1257 = vmatpush1.msra.mxu0 0.0
    %1258 = vmatprep.subr.mxu0 0.0
    %1259 = vmatpush1.msra.mxu0 0.0
    %1260 = vmatprep.subr.mxu0 0.0
    %1261 = vmatpush1.msra.mxu0 0.0
    %1262 = vmatprep.subr.mxu0 0.0
    %1263 = vmatpush1.msra.mxu0 0.0
    %1264 = vmatprep.subr.mxu0 0.0
    %1265 = vmatpush1.msra.mxu0 0.0
    %1266 = vmatprep.subr.mxu0 0.0
    %1267 = vmatpush1.msra.mxu0 0.0
    %1268 = vmatprep.subr.mxu0 0.0
    %1269 = vmatpush1.msra.mxu0 0.0
    %1270 = vmatprep.subr.mxu0 0.0
    %1271 = vmatpush1.msra.mxu0 0.0
    %1272 = vmatprep.subr.mxu0 0.0
    %1273 = vmatpush1.msra.mxu0 0.0
    %1274 = vmatprep.subr.mxu0 0.0
    %1275 = vmatpush1.msra.mxu0 0.0
    %1276 = vmatprep.subr.mxu0 0.0
    %1277 = vmatpush1.msra.mxu0 0.0
    %1278 = vmatprep.subr.mxu0 0.0
    %1279 = vmatpush1.msra.mxu0 0.0
    %1280 = vmatprep.subr.mxu0 0.0
    %1281 = vmatpush1.msra.mxu0 0.0
    %1282 = vmatprep.subr.mxu0 0.0
    %1283 = vmatpush1.msra.mxu0 0.0
    %1284 = vmatprep.mubr.f32.mxu0 0.0
    %v1285 = vand.u32 %v1216, 4294901760
    %v1286 = vsub.f32 %v1216, %v1285
    %v1287 = vand.u32 %v1286, 4294901760
    %v1288 = vsub.f32 %v1286, %v1287
    %v1289 = vand.u32 %v1288, 4294901760
    %1290 = vmatmul.mubr.f32.gmra.mrb[0].mxu0 %v1289
    %v1291 = vpop.f32.mrb[0].mxu0
    %v1292 = vadd.f32 0.0, %v1291
    %v1293 = vpop.f32.mrb[0].mxu0
    %1294 = vdwg.mxu0
    %1295 = vmatprep.subr.mxu0 0.0
    %v1296 = vand.u32 %v1213, 4294901760
    %v1297 = vsub.f32 %v1213, %v1296
    %v1298 = vand.u32 %v1297, 4294901760
    %v1299 = vsub.f32 %v1297, %v1298
    %v1300 = vand.u32 %v1299, 4294901760
    %1301 = vmatpush1.msra.mxu0 %v1300
    %1302 = vmatprep.subr.mxu0 0.0
    %v1303 = vand.u32 %v1214, 4294901760
    %v1304 = vsub.f32 %v1214, %v1303
    %v1305 = vand.u32 %v1304, 4294901760
    %v1306 = vsub.f32 %v1304, %v1305
    %v1307 = vand.u32 %v1306, 4294901760
    %1308 = vmatpush1.msra.mxu0 %v1307
    %1309 = vmatprep.subr.mxu0 0.0
    %1310 = vmatpush1.msra.mxu0 0.0
    %1311 = vmatprep.subr.mxu0 0.0
    %1312 = vmatpush1.msra.mxu0 0.0
    %1313 = vmatprep.subr.mxu0 0.0
    %1314 = vmatpush1.msra.mxu0 0.0
    %1315 = vmatprep.subr.mxu0 0.0
    %1316 = vmatpush1.msra.mxu0 0.0
    %1317 = vmatprep.subr.mxu0 0.0
    %1318 = vmatpush1.msra.mxu0 0.0
    %1319 = vmatprep.subr.mxu0 0.0
    %1320 = vmatpush1.msra.mxu0 0.0
    %1321 = vmatprep.subr.mxu0 0.0
    %1322 = vmatpush1.msra.mxu0 0.0
    %1323 = vmatprep.subr.mxu0 0.0
    %1324 = vmatpush1.msra.mxu0 0.0
    %1325 = vmatprep.subr.mxu0 0.0
    %1326 = vmatpush1.msra.mxu0 0.0
    %1327 = vmatprep.subr.mxu0 0.0
    %1328 = vmatpush1.msra.mxu0 0.0
    %1329 = vmatprep.subr.mxu0 0.0
    %1330 = vmatpush1.msra.mxu0 0.0
    %1331 = vmatprep.subr.mxu0 0.0
    %1332 = vmatpush1.msra.mxu0 0.0
    %1333 = vmatprep.subr.mxu0 0.0
    %1334 = vmatpush1.msra.mxu0 0.0
    %1335 = vmatprep.subr.mxu0 0.0
    %1336 = vmatpush1.msra.mxu0 0.0
    %1337 = vmatprep.subr.mxu0 0.0
    %1338 = vmatpush1.msra.mxu0 0.0
    %1339 = vmatprep.subr.mxu0 0.0
    %1340 = vmatpush1.msra.mxu0 0.0
    %1341 = vmatprep.subr.mxu0 0.0
    %1342 = vmatpush1.msra.mxu0 0.0
    %1343 = vmatprep.subr.mxu0 0.0
    %1344 = vmatpush1.msra.mxu0 0.0
    %1345 = vmatprep.subr.mxu0 0.0
    %1346 = vmatpush1.msra.mxu0 0.0
    %1347 = vmatprep.subr.mxu0 0.0
    %1348 = vmatpush1.msra.mxu0 0.0
    %1349 = vmatprep.subr.mxu0 0.0
    %1350 = vmatpush1.msra.mxu0 0.0
    %1351 = vmatprep.subr.mxu0 0.0
    %1352 = vmatpush1.msra.mxu0 0.0
    %1353 = vmatprep.subr.mxu0 0.0
    %1354 = vmatpush1.msra.mxu0 0.0
    %1355 = vmatprep.subr.mxu0 0.0
    %1356 = vmatpush1.msra.mxu0 0.0
    %1357 = vmatprep.subr.mxu0 0.0
    %1358 = vmatpush1.msra.mxu0 0.0
    %1359 = vmatprep.subr.mxu0 0.0
    %1360 = vmatpush1.msra.mxu0 0.0
    %1361 = vmatprep.subr.mxu0 0.0
    %1362 = vmatpush1.msra.mxu0 0.0
    %1363 = vmatprep.subr.mxu0 0.0
    %1364 = vmatpush1.msra.mxu0 0.0
    %1365 = vmatprep.subr.mxu0 0.0
    %1366 = vmatpush1.msra.mxu0 0.0
    %1367 = vmatprep.subr.mxu0 0.0
    %1368 = vmatpush1.msra.mxu0 0.0
    %1369 = vmatprep.mubr.f32.mxu0 0.0
    %v1370 = vand.u32 %v1216, 4294901760
    %1371 = vmatmul.mubr.f32.gmra.mrb[0].mxu0 %v1370
    %v1372 = vpop.f32.mrb[0].mxu0
    %v1373 = vadd.f32 %v1292, %v1372
    %v1374 = vpop.f32.mrb[0].mxu0
    %1375 = vdwg.mxu0
    %1376 = vmatprep.subr.mxu0 0.0
    %v1377 = vand.u32 %v1213, 4294901760
    %v1378 = vsub.f32 %v1213, %v1377
    %1379 = vmatpush1.msra.mxu0 %v1378
    %1380 = vmatprep.subr.mxu0 0.0
    %v1381 = vand.u32 %v1214, 4294901760
    %v1382 = vsub.f32 %v1214, %v1381
    %1383 = vmatpush1.msra.mxu0 %v1382
    %1384 = vmatprep.subr.mxu0 0.0
    %1385 = vmatpush1.msra.mxu0 0.0
    %1386 = vmatprep.subr.mxu0 0.0
    %1387 = vmatpush1.msra.mxu0 0.0
    %1388 = vmatprep.subr.mxu0 0.0
    %1389 = vmatpush1.msra.mxu0 0.0
    %1390 = vmatprep.subr.mxu0 0.0
    %1391 = vmatpush1.msra.mxu0 0.0
    %1392 = vmatprep.subr.mxu0 0.0
    %1393 = vmatpush1.msra.mxu0 0.0
    %1394 = vmatprep.subr.mxu0 0.0
    %1395 = vmatpush1.msra.mxu0 0.0
    %1396 = vmatprep.subr.mxu0 0.0
    %1397 = vmatpush1.msra.mxu0 0.0
    %1398 = vmatprep.subr.mxu0 0.0
    %1399 = vmatpush1.msra.mxu0 0.0
    %1400 = vmatprep.subr.mxu0 0.0
    %1401 = vmatpush1.msra.mxu0 0.0
    %1402 = vmatprep.subr.mxu0 0.0
    %1403 = vmatpush1.msra.mxu0 0.0
    %1404 = vmatprep.subr.mxu0 0.0
    %1405 = vmatpush1.msra.mxu0 0.0
    %1406 = vmatprep.subr.mxu0 0.0
    %1407 = vmatpush1.msra.mxu0 0.0
    %1408 = vmatprep.subr.mxu0 0.0
    %1409 = vmatpush1.msra.mxu0 0.0
    %1410 = vmatprep.subr.mxu0 0.0
    %1411 = vmatpush1.msra.mxu0 0.0
    %1412 = vmatprep.subr.mxu0 0.0
    %1413 = vmatpush1.msra.mxu0 0.0
    %1414 = vmatprep.subr.mxu0 0.0
    %1415 = vmatpush1.msra.mxu0 0.0
    %1416 = vmatprep.subr.mxu0 0.0
    %1417 = vmatpush1.msra.mxu0 0.0
    %1418 = vmatprep.subr.mxu0 0.0
    %1419 = vmatpush1.msra.mxu0 0.0
    %1420 = vmatprep.subr.mxu0 0.0
    %1421 = vmatpush1.msra.mxu0 0.0
    %1422 = vmatprep.subr.mxu0 0.0
    %1423 = vmatpush1.msra.mxu0 0.0
    %1424 = vmatprep.subr.mxu0 0.0
    %1425 = vmatpush1.msra.mxu0 0.0
    %1426 = vmatprep.subr.mxu0 0.0
    %1427 = vmatpush1.msra.mxu0 0.0
    %1428 = vmatprep.subr.mxu0 0.0
    %1429 = vmatpush1.msra.mxu0 0.0
    %1430 = vmatprep.subr.mxu0 0.0
    %1431 = vmatpush1.msra.mxu0 0.0
    %1432 = vmatprep.subr.mxu0 0.0
    %1433 = vmatpush1.msra.mxu0 0.0
    %1434 = vmatprep.subr.mxu0 0.0
    %1435 = vmatpush1.msra.mxu0 0.0
    %1436 = vmatprep.subr.mxu0 0.0
    %1437 = vmatpush1.msra.mxu0 0.0
    %1438 = vmatprep.subr.mxu0 0.0
    %1439 = vmatpush1.msra.mxu0 0.0
    %1440 = vmatprep.subr.mxu0 0.0
    %1441 = vmatpush1.msra.mxu0 0.0
    %1442 = vmatprep.subr.mxu0 0.0
    %1443 = vmatpush1.msra.mxu0 0.0
    %1444 = vmatprep.mubr.f32.mxu0 0.0
    %v1445 = vand.u32 %v1216, 4294901760
    %v1446 = vsub.f32 %v1216, %v1445
    %1447 = vmatmul.mubr.f32.gmra.mrb[0].mxu0 %v1446
    %v1448 = vpop.f32.mrb[0].mxu0
    %v1449 = vadd.f32 %v1373, %v1448
    %v1450 = vpop.f32.mrb[0].mxu0
    %1451 = vdwg.mxu0
    %1452 = vmatprep.subr.mxu0 0.0
    %v1453 = vand.u32 %v1213, 4294901760
    %1454 = vmatpush1.msra.mxu0 %v1453
    %1455 = vmatprep.subr.mxu0 0.0
    %v1456 = vand.u32 %v1214, 4294901760
    %1457 = vmatpush1.msra.mxu0 %v1456
    %1458 = vmatprep.subr.mxu0 0.0
    %1459 = vmatpush1.msra.mxu0 0.0
    %1460 = vmatprep.subr.mxu0 0.0
    %1461 = vmatpush1.msra.mxu0 0.0
    %1462 = vmatprep.subr.mxu0 0.0
    %1463 = vmatpush1.msra.mxu0 0.0
    %1464 = vmatprep.subr.mxu0 0.0
    %1465 = vmatpush1.msra.mxu0 0.0
    %1466 = vmatprep.subr.mxu0 0.0
    %1467 = vmatpush1.msra.mxu0 0.0
    %1468 = vmatprep.subr.mxu0 0.0
    %1469 = vmatpush1.msra.mxu0 0.0
    %1470 = vmatprep.subr.mxu0 0.0
    %1471 = vmatpush1.msra.mxu0 0.0
    %1472 = vmatprep.subr.mxu0 0.0
    %1473 = vmatpush1.msra.mxu0 0.0
    %1474 = vmatprep.subr.mxu0 0.0
    %1475 = vmatpush1.msra.mxu0 0.0
    %1476 = vmatprep.subr.mxu0 0.0
    %1477 = vmatpush1.msra.mxu0 0.0
    %1478 = vmatprep.subr.mxu0 0.0
    %1479 = vmatpush1.msra.mxu0 0.0
    %1480 = vmatprep.subr.mxu0 0.0
    %1481 = vmatpush1.msra.mxu0 0.0
    %1482 = vmatprep.subr.mxu0 0.0
    %1483 = vmatpush1.msra.mxu0 0.0
    %1484 = vmatprep.subr.mxu0 0.0
    %1485 = vmatpush1.msra.mxu0 0.0
    %1486 = vmatprep.subr.mxu0 0.0
    %1487 = vmatpush1.msra.mxu0 0.0
    %1488 = vmatprep.subr.mxu0 0.0
    %1489 = vmatpush1.msra.mxu0 0.0
    %1490 = vmatprep.subr.mxu0 0.0
    %1491 = vmatpush1.msra.mxu0 0.0
    %1492 = vmatprep.subr.mxu0 0.0
    %1493 = vmatpush1.msra.mxu0 0.0
    %1494 = vmatprep.subr.mxu0 0.0
    %1495 = vmatpush1.msra.mxu0 0.0
    %1496 = vmatprep.subr.mxu0 0.0
    %1497 = vmatpush1.msra.mxu0 0.0
    %1498 = vmatprep.subr.mxu0 0.0
    %1499 = vmatpush1.msra.mxu0 0.0
    %1500 = vmatprep.subr.mxu0 0.0
    %1501 = vmatpush1.msra.mxu0 0.0
    %1502 = vmatprep.subr.mxu0 0.0
    %1503 = vmatpush1.msra.mxu0 0.0
    %1504 = vmatprep.subr.mxu0 0.0
    %1505 = vmatpush1.msra.mxu0 0.0
    %1506 = vmatprep.subr.mxu0 0.0
    %1507 = vmatpush1.msra.mxu0 0.0
    %1508 = vmatprep.subr.mxu0 0.0
    %1509 = vmatpush1.msra.mxu0 0.0
    %1510 = vmatprep.subr.mxu0 0.0
    %1511 = vmatpush1.msra.mxu0 0.0
    %1512 = vmatprep.subr.mxu0 0.0
    %1513 = vmatpush1.msra.mxu0 0.0
    %1514 = vmatprep.subr.mxu0 0.0
    %1515 = vmatpush1.msra.mxu0 0.0
    %1516 = vmatprep.subr.mxu0 0.0
    %1517 = vmatpush1.msra.mxu0 0.0
    %1518 = vmatprep.mubr.f32.mxu0 0.0
    %v1519 = vand.u32 %v1216, 4294901760
    %v1520 = vsub.f32 %v1216, %v1519
    %v1521 = vand.u32 %v1520, 4294901760
    %1522 = vmatmul.mubr.f32.gmra.mrb[0].mxu0 %v1521
    %v1523 = vpop.f32.mrb[0].mxu0
    %v1524 = vadd.f32 %v1449, %v1523
    %v1525 = vpop.f32.mrb[0].mxu0
    %1526 = vdwg.mxu0
    %1527 = vmatprep.subr.mxu0 0.0
    %v1528 = vand.u32 %v1213, 4294901760
    %v1529 = vsub.f32 %v1213, %v1528
    %v1530 = vand.u32 %v1529, 4294901760
    %1531 = vmatpush1.msra.mxu0 %v1530
    %1532 = vmatprep.subr.mxu0 0.0
    %v1533 = vand.u32 %v1214, 4294901760
    %v1534 = vsub.f32 %v1214, %v1533
    %v1535 = vand.u32 %v1534, 4294901760
    %1536 = vmatpush1.msra.mxu0 %v1535
    %1537 = vmatprep.subr.mxu0 0.0
    %1538 = vmatpush1.msra.mxu0 0.0
    %1539 = vmatprep.subr.mxu0 0.0
    %1540 = vmatpush1.msra.mxu0 0.0
    %1541 = vmatprep.subr.mxu0 0.0
    %1542 = vmatpush1.msra.mxu0 0.0
    %1543 = vmatprep.subr.mxu0 0.0
    %1544 = vmatpush1.msra.mxu0 0.0
    %1545 = vmatprep.subr.mxu0 0.0
    %1546 = vmatpush1.msra.mxu0 0.0
    %1547 = vmatprep.subr.mxu0 0.0
    %1548 = vmatpush1.msra.mxu0 0.0
    %1549 = vmatprep.subr.mxu0 0.0
    %1550 = vmatpush1.msra.mxu0 0.0
    %1551 = vmatprep.subr.mxu0 0.0
    %1552 = vmatpush1.msra.mxu0 0.0
    %1553 = vmatprep.subr.mxu0 0.0
    %1554 = vmatpush1.msra.mxu0 0.0
    %1555 = vmatprep.subr.mxu0 0.0
    %1556 = vmatpush1.msra.mxu0 0.0
    %1557 = vmatprep.subr.mxu0 0.0
    %1558 = vmatpush1.msra.mxu0 0.0
    %1559 = vmatprep.subr.mxu0 0.0
    %1560 = vmatpush1.msra.mxu0 0.0
    %1561 = vmatprep.subr.mxu0 0.0
    %1562 = vmatpush1.msra.mxu0 0.0
    %1563 = vmatprep.subr.mxu0 0.0
    %1564 = vmatpush1.msra.mxu0 0.0
    %1565 = vmatprep.subr.mxu0 0.0
    %1566 = vmatpush1.msra.mxu0 0.0
    %1567 = vmatprep.subr.mxu0 0.0
    %1568 = vmatpush1.msra.mxu0 0.0
    %1569 = vmatprep.subr.mxu0 0.0
    %1570 = vmatpush1.msra.mxu0 0.0
    %1571 = vmatprep.subr.mxu0 0.0
    %1572 = vmatpush1.msra.mxu0 0.0
    %1573 = vmatprep.subr.mxu0 0.0
    %1574 = vmatpush1.msra.mxu0 0.0
    %1575 = vmatprep.subr.mxu0 0.0
    %1576 = vmatpush1.msra.mxu0 0.0
    %1577 = vmatprep.subr.mxu0 0.0
    %1578 = vmatpush1.msra.mxu0 0.0
    %1579 = vmatprep.subr.mxu0 0.0
    %1580 = vmatpush1.msra.mxu0 0.0
    %1581 = vmatprep.subr.mxu0 0.0
    %1582 = vmatpush1.msra.mxu0 0.0
    %1583 = vmatprep.subr.mxu0 0.0
    %1584 = vmatpush1.msra.mxu0 0.0
    %1585 = vmatprep.subr.mxu0 0.0
    %1586 = vmatpush1.msra.mxu0 0.0
    %1587 = vmatprep.subr.mxu0 0.0
    %1588 = vmatpush1.msra.mxu0 0.0
    %1589 = vmatprep.subr.mxu0 0.0
    %1590 = vmatpush1.msra.mxu0 0.0
    %1591 = vmatprep.subr.mxu0 0.0
    %1592 = vmatpush1.msra.mxu0 0.0
    %1593 = vmatprep.subr.mxu0 0.0
    %1594 = vmatpush1.msra.mxu0 0.0
    %1595 = vmatprep.subr.mxu0 0.0
    %1596 = vmatpush1.msra.mxu0 0.0
    %1597 = vmatprep.mubr.f32.mxu0 0.0
    %v1598 = vand.u32 %v1216, 4294901760
    %1599 = vmatmul.mubr.f32.gmra.mrb[0].mxu0 %v1598
    %v1600 = vpop.f32.mrb[0].mxu0
    %v1601 = vadd.f32 %v1524, %v1600
    %v1602 = vpop.f32.mrb[0].mxu0
    %1603 = vdwg.mxu0
    %1604 = vmatprep.subr.mxu0 0.0
    %v1605 = vand.u32 %v1213, 4294901760
    %1606 = vmatpush1.msra.mxu0 %v1605
    %1607 = vmatprep.subr.mxu0 0.0
    %v1608 = vand.u32 %v1214, 4294901760
    %1609 = vmatpush1.msra.mxu0 %v1608
    %1610 = vmatprep.subr.mxu0 0.0
    %1611 = vmatpush1.msra.mxu0 0.0
    %1612 = vmatprep.subr.mxu0 0.0
    %1613 = vmatpush1.msra.mxu0 0.0
    %1614 = vmatprep.subr.mxu0 0.0
    %1615 = vmatpush1.msra.mxu0 0.0
    %1616 = vmatprep.subr.mxu0 0.0
    %1617 = vmatpush1.msra.mxu0 0.0
    %1618 = vmatprep.subr.mxu0 0.0
    %1619 = vmatpush1.msra.mxu0 0.0
    %1620 = vmatprep.subr.mxu0 0.0
    %1621 = vmatpush1.msra.mxu0 0.0
    %1622 = vmatprep.subr.mxu0 0.0
    %1623 = vmatpush1.msra.mxu0 0.0
    %1624 = vmatprep.subr.mxu0 0.0
    %1625 = vmatpush1.msra.mxu0 0.0
    %1626 = vmatprep.subr.mxu0 0.0
    %1627 = vmatpush1.msra.mxu0 0.0
    %1628 = vmatprep.subr.mxu0 0.0
    %1629 = vmatpush1.msra.mxu0 0.0
    %1630 = vmatprep.subr.mxu0 0.0
    %1631 = vmatpush1.msra.mxu0 0.0
    %1632 = vmatprep.subr.mxu0 0.0
    %1633 = vmatpush1.msra.mxu0 0.0
    %1634 = vmatprep.subr.mxu0 0.0
    %1635 = vmatpush1.msra.mxu0 0.0
    %1636 = vmatprep.subr.mxu0 0.0
    %1637 = vmatpush1.msra.mxu0 0.0
    %1638 = vmatprep.subr.mxu0 0.0
    %1639 = vmatpush1.msra.mxu0 0.0
    %1640 = vmatprep.subr.mxu0 0.0
    %1641 = vmatpush1.msra.mxu0 0.0
    %1642 = vmatprep.subr.mxu0 0.0
    %1643 = vmatpush1.msra.mxu0 0.0
    %1644 = vmatprep.subr.mxu0 0.0
    %1645 = vmatpush1.msra.mxu0 0.0
    %1646 = vmatprep.subr.mxu0 0.0
    %1647 = vmatpush1.msra.mxu0 0.0
    %1648 = vmatprep.subr.mxu0 0.0
    %1649 = vmatpush1.msra.mxu0 0.0
    %1650 = vmatprep.subr.mxu0 0.0
    %1651 = vmatpush1.msra.mxu0 0.0
    %1652 = vmatprep.subr.mxu0 0.0
    %1653 = vmatpush1.msra.mxu0 0.0
    %1654 = vmatprep.subr.mxu0 0.0
    %1655 = vmatpush1.msra.mxu0 0.0
    %1656 = vmatprep.subr.mxu0 0.0
    %1657 = vmatpush1.msra.mxu0 0.0
    %1658 = vmatprep.subr.mxu0 0.0
    %1659 = vmatpush1.msra.mxu0 0.0
    %1660 = vmatprep.subr.mxu0 0.0
    %1661 = vmatpush1.msra.mxu0 0.0
    %1662 = vmatprep.subr.mxu0 0.0
    %1663 = vmatpush1.msra.mxu0 0.0
    %1664 = vmatprep.subr.mxu0 0.0
    %1665 = vmatpush1.msra.mxu0 0.0
    %1666 = vmatprep.subr.mxu0 0.0
    %1667 = vmatpush1.msra.mxu0 0.0
    %1668 = vmatprep.subr.mxu0 0.0
    %1669 = vmatpush1.msra.mxu0 0.0
    %1670 = vmatprep.mubr.f32.mxu0 0.0
    %v1671 = vand.u32 %v1216, 4294901760
    %1672 = vmatmul.mubr.f32.gmra.mrb[0].mxu0 %v1671
    %v1673 = vpop.f32.mrb[0].mxu0
    %v1674 = vadd.f32 %v1601, %v1673
    %v1675 = vpop.f32.mrb[0].mxu0
    %1676 = vdwg.mxu0
    %1678 = vset.pattern.permute.xlu0 0
    %1679 = vperm.xlu0 %1678, %v1119
    %v1680 = vpop.permute.xlu0 %1679
    %1683 = vset.pattern.permute.xlu0 0
    %1684 = vperm.xlu0 %1683, %v1125
    %v1685 = vpop.permute.xlu0 %1684
    %1688 = vset.pattern.permute.xlu0 0
    %1689 = vperm.xlu0 %1688, %v1131
    %v1690 = vpop.permute.xlu0 %1689
    %1693 = vset.pattern.permute.xlu0 0
    %1694 = vperm.xlu0 %1693, %v1137
    %v1695 = vpop.permute.xlu0 %1694
    %1698 = vset.pattern.permute.xlu0 0
    %1699 = vperm.xlu0 %1698, %v1143
    %v1700 = vpop.permute.xlu0 %1699
    %1703 = vset.pattern.permute.xlu0 0
    %1704 = vperm.xlu0 %1703, %v1149
    %v1705 = vpop.permute.xlu0 %1704
    %1708 = vset.pattern.permute.xlu0 0
    %1709 = vperm.xlu0 %1708, %v1155
    %v1710 = vpop.permute.xlu0 %1709
    %1713 = vset.pattern.permute.xlu0 0
    %1714 = vperm.xlu0 %1713, %v1161
    %v1715 = vpop.permute.xlu0 %1714
    %1718 = vset.pattern.permute.xlu0 0
    %1719 = vperm.xlu0 %1718, %v1167
    %v1720 = vpop.permute.xlu0 %1719
    %1723 = vset.pattern.permute.xlu0 0
    %1724 = vperm.xlu0 %1723, %v1173
    %v1725 = vpop.permute.xlu0 %1724
    %1728 = vset.pattern.permute.xlu0 0
    %1729 = vperm.xlu0 %1728, %v1179
    %v1730 = vpop.permute.xlu0 %1729
    %1733 = vset.pattern.permute.xlu0 0
    %1734 = vperm.xlu0 %1733, %v1185
    %v1735 = vpop.permute.xlu0 %1734
    %1738 = vset.pattern.permute.xlu0 0
    %1739 = vperm.xlu0 %1738, %v1191
    %v1740 = vpop.permute.xlu0 %1739
    %1743 = vset.pattern.permute.xlu0 0
    %1744 = vperm.xlu0 %1743, %v1197
    %v1745 = vpop.permute.xlu0 %1744
    %1748 = vset.pattern.permute.xlu0 0
    %1749 = vperm.xlu0 %1748, %v1203
    %v1750 = vpop.permute.xlu0 %1749
    %1753 = vset.pattern.permute.xlu0 0
    %1754 = vperm.xlu0 %1753, %v1209
    %v1755 = vpop.permute.xlu0 %1754
    %v1757 = vlaneseq
    %v1758 = vshrl.u32 %v1757, 7
    %v1759 = vsub.s32 0, %v1758
    %v1760 = vrot.slane %v1674, %v1759
    %v1761 = vadd.f32 %v1680, %v1760
    %v1762 = vadd.f32 %v1685, %v1760
    %v1763 = vadd.f32 %v1690, %v1760
    %v1764 = vadd.f32 %v1695, %v1760
    %v1765 = vadd.f32 %v1700, %v1760
    %v1766 = vadd.f32 %v1705, %v1760
    %v1767 = vadd.f32 %v1710, %v1760
    %v1768 = vadd.f32 %v1715, %v1760
    %v1769 = vadd.f32 %v1720, %v1760
    %v1770 = vadd.f32 %v1725, %v1760
    %v1771 = vadd.f32 %v1730, %v1760
    %v1772 = vadd.f32 %v1735, %v1760
    %v1773 = vadd.f32 %v1740, %v1760
    %v1774 = vadd.f32 %v1745, %v1760
    %v1775 = vadd.f32 %v1750, %v1760
    %v1776 = vadd.f32 %v1755, %v1760
    %v1777 = vmul.f32 %v1761, 0.2
    %v1778 = vmul.f32 %v1762, 0.2
    %v1779 = vmul.f32 %v1763, 0.2
    %v1780 = vmul.f32 %v1764, 0.2
    %v1781 = vmul.f32 %v1765, 0.2
    %v1782 = vmul.f32 %v1766, 0.2
    %v1783 = vmul.f32 %v1767, 0.2
    %v1784 = vmul.f32 %v1768, 0.2
    %v1785 = vmul.f32 %v1769, 0.2
    %v1786 = vmul.f32 %v1770, 0.2
    %v1787 = vmul.f32 %v1771, 0.2
    %v1788 = vmul.f32 %v1772, 0.2
    %v1789 = vmul.f32 %v1773, 0.2
    %v1790 = vmul.f32 %v1774, 0.2
    %v1791 = vmul.f32 %v1775, 0.2
    %v1792 = vmul.f32 %v1776, 0.2
    %v1793 = vmax.f32 %v1761, %v1777
    %v1794 = vmax.f32 %v1762, %v1778
    %v1795 = vmax.f32 %v1763, %v1779
    %v1796 = vmax.f32 %v1764, %v1780
    %v1797 = vmax.f32 %v1765, %v1781
    %v1798 = vmax.f32 %v1766, %v1782
    %v1799 = vmax.f32 %v1767, %v1783
    %v1800 = vmax.f32 %v1768, %v1784
    %v1801 = vmax.f32 %v1769, %v1785
    %v1802 = vmax.f32 %v1770, %v1786
    %v1803 = vmax.f32 %v1771, %v1787
    %v1804 = vmax.f32 %v1772, %v1788
    %v1805 = vmax.f32 %v1773, %v1789
    %v1806 = vmax.f32 %v1774, %v1790
    %v1807 = vmax.f32 %v1775, %v1791
    %v1808 = vmax.f32 %v1776, %v1792
    %s1809 = sld [smem:[#allocation3]]
    %v1810 = vstv %s1809
    %v1811 = vmul.f32 %v1810, %v1793
    %v1812 = vmul.f32 %v1810, %v1794
    %v1813 = vmul.f32 %v1810, %v1795
    %v1814 = vmul.f32 %v1810, %v1796
    %v1815 = vmul.f32 %v1810, %v1797
    %v1816 = vmul.f32 %v1810, %v1798
    %v1817 = vmul.f32 %v1810, %v1799
    %v1818 = vmul.f32 %v1810, %v1800
    %v1819 = vmul.f32 %v1810, %v1801
    %v1820 = vmul.f32 %v1810, %v1802
    %v1821 = vmul.f32 %v1810, %v1803
    %v1822 = vmul.f32 %v1810, %v1804
    %v1823 = vmul.f32 %v1810, %v1805
    %v1824 = vmul.f32 %v1810, %v1806
    %v1825 = vmul.f32 %v1810, %v1807
    %v1826 = vmul.f32 %v1810, %v1808
    %v1827 = vadd.f32 %v1811, 0.0
    %v1828 = vadd.f32 %v1812, 0.0
    %v1829 = vadd.f32 %v1813, 0.0
    %v1830 = vadd.f32 %v1814, 0.0
    %v1831 = vadd.f32 %v1815, 0.0
    %v1832 = vadd.f32 %v1816, 0.0
    %v1833 = vadd.f32 %v1817, 0.0
    %v1834 = vadd.f32 %v1818, 0.0
    %v1835 = vadd.f32 %v1819, 0.0
    %v1836 = vadd.f32 %v1820, 0.0
    %v1837 = vadd.f32 %v1821, 0.0
    %v1838 = vadd.f32 %v1822, 0.0
    %v1839 = vadd.f32 %v1823, 0.0
    %v1840 = vadd.f32 %v1824, 0.0
    %v1841 = vadd.f32 %v1825, 0.0
    %v1842 = vadd.f32 %v1826, 0.0
    %1843 = vset.pattern.permute.xlu0 1
    %1844 = vperm.xlu0 %1843, %v1119
    %v1845 = vpop.permute.xlu0 %1844
    %1847 = vset.pattern.permute.xlu0 1
    %1848 = vperm.xlu0 %1847, %v1125
    %v1849 = vpop.permute.xlu0 %1848
    %1851 = vset.pattern.permute.xlu0 1
    %1852 = vperm.xlu0 %1851, %v1131
    %v1853 = vpop.permute.xlu0 %1852
    %1855 = vset.pattern.permute.xlu0 1
    %1856 = vperm.xlu0 %1855, %v1137
    %v1857 = vpop.permute.xlu0 %1856
    %1859 = vset.pattern.permute.xlu0 1
    %1860 = vperm.xlu0 %1859, %v1143
    %v1861 = vpop.permute.xlu0 %1860
    %1863 = vset.pattern.permute.xlu0 1
    %1864 = vperm.xlu0 %1863, %v1149
    %v1865 = vpop.permute.xlu0 %1864
    %1867 = vset.pattern.permute.xlu0 1
    %1868 = vperm.xlu0 %1867, %v1155
    %v1869 = vpop.permute.xlu0 %1868
    %1871 = vset.pattern.permute.xlu0 1
    %1872 = vperm.xlu0 %1871, %v1161
    %v1873 = vpop.permute.xlu0 %1872
    %1875 = vset.pattern.permute.xlu0 1
    %1876 = vperm.xlu0 %1875, %v1167
    %v1877 = vpop.permute.xlu0 %1876
    %1879 = vset.pattern.permute.xlu0 1
    %1880 = vperm.xlu0 %1879, %v1173
    %v1881 = vpop.permute.xlu0 %1880
    %1883 = vset.pattern.permute.xlu0 1
    %1884 = vperm.xlu0 %1883, %v1179
    %v1885 = vpop.permute.xlu0 %1884
    %1887 = vset.pattern.permute.xlu0 1
    %1888 = vperm.xlu0 %1887, %v1185
    %v1889 = vpop.permute.xlu0 %1888
    %1891 = vset.pattern.permute.xlu0 1
    %1892 = vperm.xlu0 %1891, %v1191
    %v1893 = vpop.permute.xlu0 %1892
    %1895 = vset.pattern.permute.xlu0 1
    %1896 = vperm.xlu0 %1895, %v1197
    %v1897 = vpop.permute.xlu0 %1896
    %1899 = vset.pattern.permute.xlu0 1
    %1900 = vperm.xlu0 %1899, %v1203
    %v1901 = vpop.permute.xlu0 %1900
    %1903 = vset.pattern.permute.xlu0 1
    %1904 = vperm.xlu0 %1903, %v1209
    %v1905 = vpop.permute.xlu0 %1904
    %v1907 = vlaneseq
    %v1908 = vshrl.u32 %v1907, 7
    %v1909 = vsub.s32 1, %v1908
    %v1910 = vrot.slane %v1674, %v1909
    %v1911 = vadd.f32 %v1845, %v1910
    %v1912 = vadd.f32 %v1849, %v1910
    %v1913 = vadd.f32 %v1853, %v1910
    %v1914 = vadd.f32 %v1857, %v1910
    %v1915 = vadd.f32 %v1861, %v1910
    %v1916 = vadd.f32 %v1865, %v1910
    %v1917 = vadd.f32 %v1869, %v1910
    %v1918 = vadd.f32 %v1873, %v1910
    %v1919 = vadd.f32 %v1877, %v1910
    %v1920 = vadd.f32 %v1881, %v1910
    %v1921 = vadd.f32 %v1885, %v1910
    %v1922 = vadd.f32 %v1889, %v1910
    %v1923 = vadd.f32 %v1893, %v1910
    %v1924 = vadd.f32 %v1897, %v1910
    %v1925 = vadd.f32 %v1901, %v1910
    %v1926 = vadd.f32 %v1905, %v1910
    %v1927 = vmul.f32 %v1911, 0.2
    %v1928 = vmul.f32 %v1912, 0.2
    %v1929 = vmul.f32 %v1913, 0.2
    %v1930 = vmul.f32 %v1914, 0.2
    %v1931 = vmul.f32 %v1915, 0.2
    %v1932 = vmul.f32 %v1916, 0.2
    %v1933 = vmul.f32 %v1917, 0.2
    %v1934 = vmul.f32 %v1918, 0.2
    %v1935 = vmul.f32 %v1919, 0.2
    %v1936 = vmul.f32 %v1920, 0.2
    %v1937 = vmul.f32 %v1921, 0.2
    %v1938 = vmul.f32 %v1922, 0.2
    %v1939 = vmul.f32 %v1923, 0.2
    %v1940 = vmul.f32 %v1924, 0.2
    %v1941 = vmul.f32 %v1925, 0.2
    %v1942 = vmul.f32 %v1926, 0.2
    %v1943 = vmax.f32 %v1911, %v1927
    %v1944 = vmax.f32 %v1912, %v1928
    %v1945 = vmax.f32 %v1913, %v1929
    %v1946 = vmax.f32 %v1914, %v1930
    %v1947 = vmax.f32 %v1915, %v1931
    %v1948 = vmax.f32 %v1916, %v1932
    %v1949 = vmax.f32 %v1917, %v1933
    %v1950 = vmax.f32 %v1918, %v1934
    %v1951 = vmax.f32 %v1919, %v1935
    %v1952 = vmax.f32 %v1920, %v1936
    %v1953 = vmax.f32 %v1921, %v1937
    %v1954 = vmax.f32 %v1922, %v1938
    %v1955 = vmax.f32 %v1923, %v1939
    %v1956 = vmax.f32 %v1924, %v1940
    %v1957 = vmax.f32 %v1925, %v1941
    %v1958 = vmax.f32 %v1926, %v1942
    %s1959 = sld [smem:[#allocation3 + $0x1]]
    %v1960 = vstv %s1959
    %v1961 = vmul.f32 %v1960, %v1943
    %v1962 = vmul.f32 %v1960, %v1944
    %v1963 = vmul.f32 %v1960, %v1945
    %v1964 = vmul.f32 %v1960, %v1946
    %v1965 = vmul.f32 %v1960, %v1947
    %v1966 = vmul.f32 %v1960, %v1948
    %v1967 = vmul.f32 %v1960, %v1949
    %v1968 = vmul.f32 %v1960, %v1950
    %v1969 = vmul.f32 %v1960, %v1951
    %v1970 = vmul.f32 %v1960, %v1952
    %v1971 = vmul.f32 %v1960, %v1953
    %v1972 = vmul.f32 %v1960, %v1954
    %v1973 = vmul.f32 %v1960, %v1955
    %v1974 = vmul.f32 %v1960, %v1956
    %v1975 = vmul.f32 %v1960, %v1957
    %v1976 = vmul.f32 %v1960, %v1958
    %v1977 = vadd.f32 %v1827, %v1961
    %v1978 = vadd.f32 %v1828, %v1962
    %v1979 = vadd.f32 %v1829, %v1963
    %v1980 = vadd.f32 %v1830, %v1964
    %v1981 = vadd.f32 %v1831, %v1965
    %v1982 = vadd.f32 %v1832, %v1966
    %v1983 = vadd.f32 %v1833, %v1967
    %v1984 = vadd.f32 %v1834, %v1968
    %v1985 = vadd.f32 %v1835, %v1969
    %v1986 = vadd.f32 %v1836, %v1970
    %v1987 = vadd.f32 %v1837, %v1971
    %v1988 = vadd.f32 %v1838, %v1972
    %v1989 = vadd.f32 %v1839, %v1973
    %v1990 = vadd.f32 %v1840, %v1974
    %v1991 = vadd.f32 %v1841, %v1975
    %v1992 = vadd.f32 %v1842, %v1976
    %1993 = vset.pattern.permute.xlu0 2
    %1994 = vperm.xlu0 %1993, %v1119
    %v1995 = vpop.permute.xlu0 %1994
    %1997 = vset.pattern.permute.xlu0 2
    %1998 = vperm.xlu0 %1997, %v1125
    %v1999 = vpop.permute.xlu0 %1998
    %2001 = vset.pattern.permute.xlu0 2
    %2002 = vperm.xlu0 %2001, %v1131
    %v2003 = vpop.permute.xlu0 %2002
    %2005 = vset.pattern.permute.xlu0 2
    %2006 = vperm.xlu0 %2005, %v1137
    %v2007 = vpop.permute.xlu0 %2006
    %2009 = vset.pattern.permute.xlu0 2
    %2010 = vperm.xlu0 %2009, %v1143
    %v2011 = vpop.permute.xlu0 %2010
    %2013 = vset.pattern.permute.xlu0 2
    %2014 = vperm.xlu0 %2013, %v1149
    %v2015 = vpop.permute.xlu0 %2014
    %2017 = vset.pattern.permute.xlu0 2
    %2018 = vperm.xlu0 %2017, %v1155
    %v2019 = vpop.permute.xlu0 %2018
    %2021 = vset.pattern.permute.xlu0 2
    %2022 = vperm.xlu0 %2021, %v1161
    %v2023 = vpop.permute.xlu0 %2022
    %2025 = vset.pattern.permute.xlu0 2
    %2026 = vperm.xlu0 %2025, %v1167
    %v2027 = vpop.permute.xlu0 %2026
    %2029 = vset.pattern.permute.xlu0 2
    %2030 = vperm.xlu0 %2029, %v1173
    %v2031 = vpop.permute.xlu0 %2030
    %2033 = vset.pattern.permute.xlu0 2
    %2034 = vperm.xlu0 %2033, %v1179
    %v2035 = vpop.permute.xlu0 %2034
    %2037 = vset.pattern.permute.xlu0 2
    %2038 = vperm.xlu0 %2037, %v1185
    %v2039 = vpop.permute.xlu0 %2038
    %2041 = vset.pattern.permute.xlu0 2
    %2042 = vperm.xlu0 %2041, %v1191
    %v2043 = vpop.permute.xlu0 %2042
    %2045 = vset.pattern.permute.xlu0 2
    %2046 = vperm.xlu0 %2045, %v1197
    %v2047 = vpop.permute.xlu0 %2046
    %2049 = vset.pattern.permute.xlu0 2
    %2050 = vperm.xlu0 %2049, %v1203
    %v2051 = vpop.permute.xlu0 %2050
    %2053 = vset.pattern.permute.xlu0 2
    %2054 = vperm.xlu0 %2053, %v1209
    %v2055 = vpop.permute.xlu0 %2054
    %v2057 = vlaneseq
    %v2058 = vshrl.u32 %v2057, 7
    %v2059 = vsub.s32 2, %v2058
    %v2060 = vrot.slane %v1674, %v2059
    %v2061 = vadd.f32 %v1995, %v2060
    %v2062 = vadd.f32 %v1999, %v2060
    %v2063 = vadd.f32 %v2003, %v2060
    %v2064 = vadd.f32 %v2007, %v2060
    %v2065 = vadd.f32 %v2011, %v2060
    %v2066 = vadd.f32 %v2015, %v2060
    %v2067 = vadd.f32 %v2019, %v2060
    %v2068 = vadd.f32 %v2023, %v2060
    %v2069 = vadd.f32 %v2027, %v2060
    %v2070 = vadd.f32 %v2031, %v2060
    %v2071 = vadd.f32 %v2035, %v2060
    %v2072 = vadd.f32 %v2039, %v2060
    %v2073 = vadd.f32 %v2043, %v2060
    %v2074 = vadd.f32 %v2047, %v2060
    %v2075 = vadd.f32 %v2051, %v2060
    %v2076 = vadd.f32 %v2055, %v2060
    %v2077 = vmul.f32 %v2061, 0.2
    %v2078 = vmul.f32 %v2062, 0.2
    %v2079 = vmul.f32 %v2063, 0.2
    %v2080 = vmul.f32 %v2064, 0.2
    %v2081 = vmul.f32 %v2065, 0.2
    %v2082 = vmul.f32 %v2066, 0.2
    %v2083 = vmul.f32 %v2067, 0.2
    %v2084 = vmul.f32 %v2068, 0.2
    %v2085 = vmul.f32 %v2069, 0.2
    %v2086 = vmul.f32 %v2070, 0.2
    %v2087 = vmul.f32 %v2071, 0.2
    %v2088 = vmul.f32 %v2072, 0.2
    %v2089 = vmul.f32 %v2073, 0.2
    %v2090 = vmul.f32 %v2074, 0.2
    %v2091 = vmul.f32 %v2075, 0.2
    %v2092 = vmul.f32 %v2076, 0.2
    %v2093 = vmax.f32 %v2061, %v2077
    %v2094 = vmax.f32 %v2062, %v2078
    %v2095 = vmax.f32 %v2063, %v2079
    %v2096 = vmax.f32 %v2064, %v2080
    %v2097 = vmax.f32 %v2065, %v2081
    %v2098 = vmax.f32 %v2066, %v2082
    %v2099 = vmax.f32 %v2067, %v2083
    %v2100 = vmax.f32 %v2068, %v2084
    %v2101 = vmax.f32 %v2069, %v2085
    %v2102 = vmax.f32 %v2070, %v2086
    %v2103 = vmax.f32 %v2071, %v2087
    %v2104 = vmax.f32 %v2072, %v2088
    %v2105 = vmax.f32 %v2073, %v2089
    %v2106 = vmax.f32 %v2074, %v2090
    %v2107 = vmax.f32 %v2075, %v2091
    %v2108 = vmax.f32 %v2076, %v2092
    %s2109 = sld [smem:[#allocation3 + $0x2]]
    %v2110 = vstv %s2109
    %v2111 = vmul.f32 %v2110, %v2093
    %v2112 = vmul.f32 %v2110, %v2094
    %v2113 = vmul.f32 %v2110, %v2095
    %v2114 = vmul.f32 %v2110, %v2096
    %v2115 = vmul.f32 %v2110, %v2097
    %v2116 = vmul.f32 %v2110, %v2098
    %v2117 = vmul.f32 %v2110, %v2099
    %v2118 = vmul.f32 %v2110, %v2100
    %v2119 = vmul.f32 %v2110, %v2101
    %v2120 = vmul.f32 %v2110, %v2102
    %v2121 = vmul.f32 %v2110, %v2103
    %v2122 = vmul.f32 %v2110, %v2104
    %v2123 = vmul.f32 %v2110, %v2105
    %v2124 = vmul.f32 %v2110, %v2106
    %v2125 = vmul.f32 %v2110, %v2107
    %v2126 = vmul.f32 %v2110, %v2108
    %v2127 = vadd.f32 %v1977, %v2111
    %v2128 = vadd.f32 %v1978, %v2112
    %v2129 = vadd.f32 %v1979, %v2113
    %v2130 = vadd.f32 %v1980, %v2114
    %v2131 = vadd.f32 %v1981, %v2115
    %v2132 = vadd.f32 %v1982, %v2116
    %v2133 = vadd.f32 %v1983, %v2117
    %v2134 = vadd.f32 %v1984, %v2118
    %v2135 = vadd.f32 %v1985, %v2119
    %v2136 = vadd.f32 %v1986, %v2120
    %v2137 = vadd.f32 %v1987, %v2121
    %v2138 = vadd.f32 %v1988, %v2122
    %v2139 = vadd.f32 %v1989, %v2123
    %v2140 = vadd.f32 %v1990, %v2124
    %v2141 = vadd.f32 %v1991, %v2125
    %v2142 = vadd.f32 %v1992, %v2126
    %2143 = vset.pattern.permute.xlu0 3
    %2144 = vperm.xlu0 %2143, %v1119
    %v2145 = vpop.permute.xlu0 %2144
    %2147 = vset.pattern.permute.xlu0 3
    %2148 = vperm.xlu0 %2147, %v1125
    %v2149 = vpop.permute.xlu0 %2148
    %2151 = vset.pattern.permute.xlu0 3
    %2152 = vperm.xlu0 %2151, %v1131
    %v2153 = vpop.permute.xlu0 %2152
    %2155 = vset.pattern.permute.xlu0 3
    %2156 = vperm.xlu0 %2155, %v1137
    %v2157 = vpop.permute.xlu0 %2156
    %2159 = vset.pattern.permute.xlu0 3
    %2160 = vperm.xlu0 %2159, %v1143
    %v2161 = vpop.permute.xlu0 %2160
    %2163 = vset.pattern.permute.xlu0 3
    %2164 = vperm.xlu0 %2163, %v1149
    %v2165 = vpop.permute.xlu0 %2164
    %2167 = vset.pattern.permute.xlu0 3
    %2168 = vperm.xlu0 %2167, %v1155
    %v2169 = vpop.permute.xlu0 %2168
    %2171 = vset.pattern.permute.xlu0 3
    %2172 = vperm.xlu0 %2171, %v1161
    %v2173 = vpop.permute.xlu0 %2172
    %2175 = vset.pattern.permute.xlu0 3
    %2176 = vperm.xlu0 %2175, %v1167
    %v2177 = vpop.permute.xlu0 %2176
    %2179 = vset.pattern.permute.xlu0 3
    %2180 = vperm.xlu0 %2179, %v1173
    %v2181 = vpop.permute.xlu0 %2180
    %2183 = vset.pattern.permute.xlu0 3
    %2184 = vperm.xlu0 %2183, %v1179
    %v2185 = vpop.permute.xlu0 %2184
    %2187 = vset.pattern.permute.xlu0 3
    %2188 = vperm.xlu0 %2187, %v1185
    %v2189 = vpop.permute.xlu0 %2188
    %2191 = vset.pattern.permute.xlu0 3
    %2192 = vperm.xlu0 %2191, %v1191
    %v2193 = vpop.permute.xlu0 %2192
    %2195 = vset.pattern.permute.xlu0 3
    %2196 = vperm.xlu0 %2195, %v1197
    %v2197 = vpop.permute.xlu0 %2196
    %2199 = vset.pattern.permute.xlu0 3
    %2200 = vperm.xlu0 %2199, %v1203
    %v2201 = vpop.permute.xlu0 %2200
    %2203 = vset.pattern.permute.xlu0 3
    %2204 = vperm.xlu0 %2203, %v1209
    %v2205 = vpop.permute.xlu0 %2204
    %v2207 = vlaneseq
    %v2208 = vshrl.u32 %v2207, 7
    %v2209 = vsub.s32 3, %v2208
    %v2210 = vrot.slane %v1674, %v2209
    %v2211 = vadd.f32 %v2145, %v2210
    %v2212 = vadd.f32 %v2149, %v2210
    %v2213 = vadd.f32 %v2153, %v2210
    %v2214 = vadd.f32 %v2157, %v2210
    %v2215 = vadd.f32 %v2161, %v2210
    %v2216 = vadd.f32 %v2165, %v2210
    %v2217 = vadd.f32 %v2169, %v2210
    %v2218 = vadd.f32 %v2173, %v2210
    %v2219 = vadd.f32 %v2177, %v2210
    %v2220 = vadd.f32 %v2181, %v2210
    %v2221 = vadd.f32 %v2185, %v2210
    %v2222 = vadd.f32 %v2189, %v2210
    %v2223 = vadd.f32 %v2193, %v2210
    %v2224 = vadd.f32 %v2197, %v2210
    %v2225 = vadd.f32 %v2201, %v2210
    %v2226 = vadd.f32 %v2205, %v2210
    %v2227 = vmul.f32 %v2211, 0.2
    %v2228 = vmul.f32 %v2212, 0.2
    %v2229 = vmul.f32 %v2213, 0.2
    %v2230 = vmul.f32 %v2214, 0.2
    %v2231 = vmul.f32 %v2215, 0.2
    %v2232 = vmul.f32 %v2216, 0.2
    %v2233 = vmul.f32 %v2217, 0.2
    %v2234 = vmul.f32 %v2218, 0.2
    %v2235 = vmul.f32 %v2219, 0.2
    %v2236 = vmul.f32 %v2220, 0.2
    %v2237 = vmul.f32 %v2221, 0.2
    %v2238 = vmul.f32 %v2222, 0.2
    %v2239 = vmul.f32 %v2223, 0.2
    %v2240 = vmul.f32 %v2224, 0.2
    %v2241 = vmul.f32 %v2225, 0.2
    %v2242 = vmul.f32 %v2226, 0.2
    %v2243 = vmax.f32 %v2211, %v2227
    %v2244 = vmax.f32 %v2212, %v2228
    %v2245 = vmax.f32 %v2213, %v2229
    %v2246 = vmax.f32 %v2214, %v2230
    %v2247 = vmax.f32 %v2215, %v2231
    %v2248 = vmax.f32 %v2216, %v2232
    %v2249 = vmax.f32 %v2217, %v2233
    %v2250 = vmax.f32 %v2218, %v2234
    %v2251 = vmax.f32 %v2219, %v2235
    %v2252 = vmax.f32 %v2220, %v2236
    %v2253 = vmax.f32 %v2221, %v2237
    %v2254 = vmax.f32 %v2222, %v2238
    %v2255 = vmax.f32 %v2223, %v2239
    %v2256 = vmax.f32 %v2224, %v2240
    %v2257 = vmax.f32 %v2225, %v2241
    %v2258 = vmax.f32 %v2226, %v2242
    %s2259 = sld [smem:[#allocation3 + $0x3]]
    %v2260 = vstv %s2259
    %v2261 = vmul.f32 %v2260, %v2243
    %v2262 = vmul.f32 %v2260, %v2244
    %v2263 = vmul.f32 %v2260, %v2245
    %v2264 = vmul.f32 %v2260, %v2246
    %v2265 = vmul.f32 %v2260, %v2247
    %v2266 = vmul.f32 %v2260, %v2248
    %v2267 = vmul.f32 %v2260, %v2249
    %v2268 = vmul.f32 %v2260, %v2250
    %v2269 = vmul.f32 %v2260, %v2251
    %v2270 = vmul.f32 %v2260, %v2252
    %v2271 = vmul.f32 %v2260, %v2253
    %v2272 = vmul.f32 %v2260, %v2254
    %v2273 = vmul.f32 %v2260, %v2255
    %v2274 = vmul.f32 %v2260, %v2256
    %v2275 = vmul.f32 %v2260, %v2257
    %v2276 = vmul.f32 %v2260, %v2258
    %v2277 = vadd.f32 %v2127, %v2261
    %v2278 = vadd.f32 %v2128, %v2262
    %v2279 = vadd.f32 %v2129, %v2263
    %v2280 = vadd.f32 %v2130, %v2264
    %v2281 = vadd.f32 %v2131, %v2265
    %v2282 = vadd.f32 %v2132, %v2266
    %v2283 = vadd.f32 %v2133, %v2267
    %v2284 = vadd.f32 %v2134, %v2268
    %v2285 = vadd.f32 %v2135, %v2269
    %v2286 = vadd.f32 %v2136, %v2270
    %v2287 = vadd.f32 %v2137, %v2271
    %v2288 = vadd.f32 %v2138, %v2272
    %v2289 = vadd.f32 %v2139, %v2273
    %v2290 = vadd.f32 %v2140, %v2274
    %v2291 = vadd.f32 %v2141, %v2275
    %v2292 = vadd.f32 %v2142, %v2276
    %s2293 = sld [smem:[#allocation2]]
    %v2294 = vstv %s2293
    %v2295 = vadd.f32 %v2277, %v2294
    %v2296 = vadd.f32 %v2278, %v2294
    %v2297 = vadd.f32 %v2279, %v2294
    %v2298 = vadd.f32 %v2280, %v2294
    %v2299 = vadd.f32 %v2281, %v2294
    %v2300 = vadd.f32 %v2282, %v2294
    %v2301 = vadd.f32 %v2283, %v2294
    %v2302 = vadd.f32 %v2284, %v2294
    %v2303 = vadd.f32 %v2285, %v2294
    %v2304 = vadd.f32 %v2286, %v2294
    %v2305 = vadd.f32 %v2287, %v2294
    %v2306 = vadd.f32 %v2288, %v2294
    %v2307 = vadd.f32 %v2289, %v2294
    %v2308 = vadd.f32 %v2290, %v2294
    %v2309 = vadd.f32 %v2291, %v2294
    %v2310 = vadd.f32 %v2292, %v2294
    %v2311 = vld [vmem:[%s6] sm:$0xff]
    %v2312 = vld [vmem:[%s6 + $0x8] sm:$0xff]
    %v2313 = vld [vmem:[%s6 + $0x10] sm:$0xff]
    %v2314 = vld [vmem:[%s6 + $0x18] sm:$0xff]
    %v2315 = vld [vmem:[%s6 + $0x20] sm:$0xff]
    %v2316 = vld [vmem:[%s6 + $0x28] sm:$0xff]
    %v2317 = vld [vmem:[%s6 + $0x30] sm:$0xff]
    %v2318 = vld [vmem:[%s6 + $0x38] sm:$0xff]
    %v2319 = vld [vmem:[%s6 + $0x40] sm:$0xff]
    %v2320 = vld [vmem:[%s6 + $0x48] sm:$0xff]
    %v2321 = vld [vmem:[%s6 + $0x50] sm:$0xff]
    %v2322 = vld [vmem:[%s6 + $0x58] sm:$0xff]
    %v2323 = vld [vmem:[%s6 + $0x60] sm:$0xff]
    %v2324 = vld [vmem:[%s6 + $0x68] sm:$0xff]
    %v2325 = vld [vmem:[%s6 + $0x70] sm:$0xff]
    %v2326 = vld [vmem:[%s6 + $0x78] sm:$0xff]
    %vm2327 = vcmp.ne.f32.partialorder %v2311, 0.0
    %vm2328 = vcmp.ne.f32.partialorder %v2312, 0.0
    %vm2329 = vcmp.ne.f32.partialorder %v2313, 0.0
    %vm2330 = vcmp.ne.f32.partialorder %v2314, 0.0
    %vm2331 = vcmp.ne.f32.partialorder %v2315, 0.0
    %vm2332 = vcmp.ne.f32.partialorder %v2316, 0.0
    %vm2333 = vcmp.ne.f32.partialorder %v2317, 0.0
    %vm2334 = vcmp.ne.f32.partialorder %v2318, 0.0
    %vm2335 = vcmp.ne.f32.partialorder %v2319, 0.0
    %vm2336 = vcmp.ne.f32.partialorder %v2320, 0.0
    %vm2337 = vcmp.ne.f32.partialorder %v2321, 0.0
    %vm2338 = vcmp.ne.f32.partialorder %v2322, 0.0
    %vm2339 = vcmp.ne.f32.partialorder %v2323, 0.0
    %vm2340 = vcmp.ne.f32.partialorder %v2324, 0.0
    %vm2341 = vcmp.ne.f32.partialorder %v2325, 0.0
    %vm2342 = vcmp.ne.f32.partialorder %v2326, 0.0
    %v2343 = vmul.f32 %v2311, %v2295
    %v2344 = vmul.f32 %v2312, %v2296
    %v2345 = vmul.f32 %v2313, %v2297
    %v2346 = vmul.f32 %v2314, %v2298
    %v2347 = vmul.f32 %v2315, %v2299
    %v2348 = vmul.f32 %v2316, %v2300
    %v2349 = vmul.f32 %v2317, %v2301
    %v2350 = vmul.f32 %v2318, %v2302
    %v2351 = vmul.f32 %v2319, %v2303
    %v2352 = vmul.f32 %v2320, %v2304
    %v2353 = vmul.f32 %v2321, %v2305
    %v2354 = vmul.f32 %v2322, %v2306
    %v2355 = vmul.f32 %v2323, %v2307
    %v2356 = vmul.f32 %v2324, %v2308
    %v2357 = vmul.f32 %v2325, %v2309
    %v2358 = vmul.f32 %v2326, %v2310
    %v2359 = vsel %vm2327, %v2343, -1e+09
    %v2360 = vsel %vm2328, %v2344, -1e+09
    %v2361 = vsel %vm2329, %v2345, -1e+09
    %v2362 = vsel %vm2330, %v2346, -1e+09
    %v2363 = vsel %vm2331, %v2347, -1e+09
    %v2364 = vsel %vm2332, %v2348, -1e+09
    %v2365 = vsel %vm2333, %v2349, -1e+09
    %v2366 = vsel %vm2334, %v2350, -1e+09
    %v2367 = vsel %vm2335, %v2351, -1e+09
    %v2368 = vsel %vm2336, %v2352, -1e+09
    %v2369 = vsel %vm2337, %v2353, -1e+09
    %v2370 = vsel %vm2338, %v2354, -1e+09
    %v2371 = vsel %vm2339, %v2355, -1e+09
    %v2372 = vsel %vm2340, %v2356, -1e+09
    %v2373 = vsel %vm2341, %v2357, -1e+09
    %v2374 = vsel %vm2342, %v2358, -1e+09
    %v2375 = vmax.f32 %v2359, %v2363
    %v2376 = vmax.f32 %v2360, %v2364
    %v2377 = vmax.f32 %v2361, %v2365
    %v2378 = vmax.f32 %v2362, %v2366
    %v2379 = vmax.f32 %v2375, %v2367
    %v2380 = vmax.f32 %v2376, %v2368
    %v2381 = vmax.f32 %v2377, %v2369
    %v2382 = vmax.f32 %v2378, %v2370
    %v2383 = vmax.f32 %v2379, %v2371
    %v2384 = vmax.f32 %v2380, %v2372
    %v2385 = vmax.f32 %v2381, %v2373
    %v2386 = vmax.f32 %v2382, %v2374
    %v2387 = vmax.f32 %v2383, %v2384
    %v2388 = vmax.f32 %v2385, %v2386
    %v2389 = vmax.f32 %v2387, %v2388
    %v2390 = vrot.slane %v2389, 4
    %v2391 = vmax.f32 %v2389, %v2390
    %v2392 = vrot.slane %v2391, 2
    %v2393 = vmax.f32 %v2391, %v2392
    %v2394 = vrot.slane %v2393, 1
    %v2395 = vmax.f32 %v2393, %v2394
    %v2396 = vsub.f32 %v2359, %v2395
    %v2397 = vsub.f32 %v2360, %v2395
    %v2398 = vsub.f32 %v2361, %v2395
    %v2399 = vsub.f32 %v2362, %v2395
    %v2400 = vsub.f32 %v2363, %v2395
    %v2401 = vsub.f32 %v2364, %v2395
    %v2402 = vsub.f32 %v2365, %v2395
    %v2403 = vsub.f32 %v2366, %v2395
    %v2404 = vsub.f32 %v2367, %v2395
    %v2405 = vsub.f32 %v2368, %v2395
    %v2406 = vsub.f32 %v2369, %v2395
    %v2407 = vsub.f32 %v2370, %v2395
    %v2408 = vsub.f32 %v2371, %v2395
    %v2409 = vsub.f32 %v2372, %v2395
    %v2410 = vsub.f32 %v2373, %v2395
    %v2411 = vsub.f32 %v2374, %v2395
    %v2412 = vmul.f32 %v2396, 1.442695
    %v2413 = vpow.pop %v2412
    %v2414 = vmul.f32 %v2397, 1.442695
    %v2415 = vpow.pop %v2414
    %v2416 = vmul.f32 %v2398, 1.442695
    %v2417 = vpow.pop %v2416
    %v2418 = vmul.f32 %v2399, 1.442695
    %v2419 = vpow.pop %v2418
    %v2420 = vmul.f32 %v2400, 1.442695
    %v2421 = vpow.pop %v2420
    %v2422 = vmul.f32 %v2401, 1.442695
    %v2423 = vpow.pop %v2422
    %v2424 = vmul.f32 %v2402, 1.442695
    %v2425 = vpow.pop %v2424
    %v2426 = vmul.f32 %v2403, 1.442695
    %v2427 = vpow.pop %v2426
    %v2428 = vmul.f32 %v2404, 1.442695
    %v2429 = vpow.pop %v2428
    %v2430 = vmul.f32 %v2405, 1.442695
    %v2431 = vpow.pop %v2430
    %v2432 = vmul.f32 %v2406, 1.442695
    %v2433 = vpow.pop %v2432
    %v2434 = vmul.f32 %v2407, 1.442695
    %v2435 = vpow.pop %v2434
    %v2436 = vmul.f32 %v2408, 1.442695
    %v2437 = vpow.pop %v2436
    %v2438 = vmul.f32 %v2409, 1.442695
    %v2439 = vpow.pop %v2438
    %v2440 = vmul.f32 %v2410, 1.442695
    %v2441 = vpow.pop %v2440
    %v2442 = vmul.f32 %v2411, 1.442695
    %v2443 = vpow.pop %v2442
    %v2444 = vadd.f32 %v2413, %v2415
    %v2445 = vadd.f32 %v2444, %v2417
    %v2446 = vadd.f32 %v2445, %v2419
    %v2447 = vadd.f32 %v2446, %v2421
    %v2448 = vadd.f32 %v2447, %v2423
    %v2449 = vadd.f32 %v2448, %v2425
    %v2450 = vadd.f32 %v2449, %v2427
    %v2451 = vadd.f32 %v2450, %v2429
    %v2452 = vadd.f32 %v2451, %v2431
    %v2453 = vadd.f32 %v2452, %v2433
    %v2454 = vadd.f32 %v2453, %v2435
    %v2455 = vadd.f32 %v2454, %v2437
    %v2456 = vadd.f32 %v2455, %v2439
    %v2457 = vadd.f32 %v2456, %v2441
    %v2458 = vadd.f32 %v2457, %v2443
    %v2459 = vrot.slane %v2458, 4
    %v2460 = vadd.f32 %v2458, %v2459
    %v2461 = vrot.slane %v2460, 2
    %v2462 = vadd.f32 %v2460, %v2461
    %v2463 = vrot.slane %v2462, 1
    %v2464 = vadd.f32 %v2462, %v2463
    %v2465 = vrcp.pop %v2464
    %v2466 = vmul.f32 %v2464, %v2465
    %v2467 = vsub.f32 2.0, %v2466
    %v2468 = vmul.f32 %v2465, %v2467
    %v2469 = vmul.f32 %v2413, %v2468
    %v2470 = vmul.f32 %v2415, %v2468
    %v2471 = vmul.f32 %v2417, %v2468
    %v2472 = vmul.f32 %v2419, %v2468
    %v2473 = vmul.f32 %v2421, %v2468
    %v2474 = vmul.f32 %v2423, %v2468
    %v2475 = vmul.f32 %v2425, %v2468
    %v2476 = vmul.f32 %v2427, %v2468
    %v2477 = vmul.f32 %v2429, %v2468
    %v2478 = vmul.f32 %v2431, %v2468
    %v2479 = vmul.f32 %v2433, %v2468
    %v2480 = vmul.f32 %v2435, %v2468
    %v2481 = vmul.f32 %v2437, %v2468
    %v2482 = vmul.f32 %v2439, %v2468
    %v2483 = vmul.f32 %v2441, %v2468
    %v2484 = vmul.f32 %v2443, %v2468
    %2485 = vst [vmem:[#allocation6] sm:$0xff] %v2469
    %2486 = vst [vmem:[#allocation6 + $0x8] sm:$0xff] %v2470
    %2487 = vst [vmem:[#allocation6 + $0x10] sm:$0xff] %v2471
    %2488 = vst [vmem:[#allocation6 + $0x18] sm:$0xff] %v2472
    %2489 = vst [vmem:[#allocation6 + $0x20] sm:$0xff] %v2473
    %2490 = vst [vmem:[#allocation6 + $0x28] sm:$0xff] %v2474
    %2491 = vst [vmem:[#allocation6 + $0x30] sm:$0xff] %v2475
    %2492 = vst [vmem:[#allocation6 + $0x38] sm:$0xff] %v2476
    %2493 = vst [vmem:[#allocation6 + $0x40] sm:$0xff] %v2477
    %2494 = vst [vmem:[#allocation6 + $0x48] sm:$0xff] %v2478
    %2495 = vst [vmem:[#allocation6 + $0x50] sm:$0xff] %v2479
    %2496 = vst [vmem:[#allocation6 + $0x58] sm:$0xff] %v2480
    %2497 = vst [vmem:[#allocation6 + $0x60] sm:$0xff] %v2481
    %2498 = vst [vmem:[#allocation6 + $0x68] sm:$0xff] %v2482
    %2499 = vst [vmem:[#allocation6 + $0x70] sm:$0xff] %v2483
    %2500 = vst [vmem:[#allocation6 + $0x78] sm:$0xff] %v2484
    // Predicated region
    $region34: #{tpu_custom_call.1} parent=1 // pred_check
      _
    $region35: #{tpu_custom_call.1} parent=1 // pred_check_branch
      %2502 = sbr.rel (0) target = $region37
    $region36: #{tpu_custom_call.1} parent=1 // pred_region
      %s2504 = ssub.s32 2048, 2048
      %2505 = vsyncadd [#allocation4], %s2504
      %s2506 = sshll.u32 [#allocation6], 4
      %s2507 = int_to_ptr.vmem [resolvable:$true] %s2506
      %2512 = dma.vmem_to_hbm [thread:$0]  %s2507, 2048, %s7, [#allocation4], 128, 128, 8
    $region37: #{tpu_custom_call.1} parent=1 // pred_fallthru
      _
    // Predicated region
    $region38: #{tpu_custom_call.1} parent=1 // pred_check
      _
    $region39: #{tpu_custom_call.1} parent=1 // pred_check_branch
      %2514 = sbr.rel (0) target = $region41
    $region40: #{tpu_custom_call.1} parent=1 // pred_region
      %2515 = dma.done [#allocation4], 2048
    $region41: #{tpu_custom_call.1} parent=1 // pred_fallthru
      _
    %2516 = vsyncpa [#allocation4], 1
    %2517 = vsyncpa [#allocation5], 1

</llo_original>
